<compile_context>
chip_gen: v7x
topology: tpu7x:2x2x1
jax: 0.10.0
libtpu: 0.0.40
codegen_flags: <defaults>
</compile_context>

<pallas_src>
import jax
import jax.numpy as jnp
from jax.experimental import pallas as pl
from jax.experimental.pallas import tpu as pltpu

COS_EPS = 1e-6        # nn.CosineSimilarity(eps=1e-6)
LN_EPS = 1e-5         # nn.LayerNorm default eps
MID = 256             # classifier hidden width
SEQ_CHUNK = 16        # in-tile sub-chunk of the sequence reduction


def _round_up(x, m):
    return ((x + m - 1) // m) * m


def _comparation_kernel(x_ref, e_ref, ne_ref, w1_ref, b1_ref, g_ref, beta_ref,
                        w2_ref, b2_ref, out_ref, dot_acc, nx_acc):
    # x_ref, e_ref : (TB, TS, H) bf16 tiles of BERT output / picture embeddings
    # ne_ref       : (TB, H) f32 precomputed sum_s e^2 (frozen embeddings)
    # w1_ref       : (H, 256), b1_ref: (1, 256)
    # g_ref/beta   : (1, 256)  LayerNorm affine params
    # w2_ref       : (256, C_pad), b2_ref: (1, C_pad)
    # out_ref      : (TB, C_pad)  -- resident across the S grid axis
    # dot/nx_acc   : (TB, H) f32 scratch accumulators (resident across S axis)
    s = pl.program_id(1)

    @pl.when(s == 0)
    def _init():
        dot_acc[...] = jnp.zeros_like(dot_acc)
        nx_acc[...] = jnp.zeros_like(nx_acc)

    ts = x_ref.shape[1]
    n_chunks = ts // SEQ_CHUNK

    # Fused single pass over small sequence sub-chunks: reuses the x / e vregs
    # for both products and bounds live f32 temporaries (no (TB, TS, 768) f32
    # intermediates / spills when TS is large).
    @pl.loop(0, n_chunks)
    def _(c):
        off = pl.multiple_of(c * SEQ_CHUNK, SEQ_CHUNK)
        xs = x_ref[:, pl.ds(off, SEQ_CHUNK), :].astype(jnp.float32)
        es = e_ref[:, pl.ds(off, SEQ_CHUNK), :].astype(jnp.float32)
        dot_acc[...] += jnp.sum(xs * es, axis=1)
        nx_acc[...] += jnp.sum(xs * xs, axis=1)

    @pl.when(s == pl.num_programs(1) - 1)
    def _finalize():
        # cosine similarity (current PyTorch ATen eps semantics):
        #   dot / sqrt(max(|x|^2 * |e|^2, eps^2))
        denom2 = jnp.maximum(nx_acc[...] * ne_ref[...], COS_EPS * COS_EPS)
        cos = dot_acc[...] * jax.lax.rsqrt(denom2)                  # (TB, H)

        # ---- Linear(768 -> 256) ----
        h = jnp.dot(cos, w1_ref[...], preferred_element_type=jnp.float32)
        h = h + b1_ref[...]                                         # (TB, 256)

        # ---- LayerNorm(256) ----
        mu = jnp.mean(h, axis=-1, keepdims=True)
        var = jnp.mean((h - mu) * (h - mu), axis=-1, keepdims=True)
        hn = (h - mu) * jax.lax.rsqrt(var + LN_EPS)
        hn = hn * g_ref[...] + beta_ref[...]

        # ---- ReLU + Dropout(0.2) [inference -> identity] ----
        r = jnp.maximum(hn, 0.0)

        # ---- Linear(256 -> C_pad), lane-dense store ----
        out = jnp.dot(r, w2_ref[...], preferred_element_type=jnp.float32)
        out_ref[...] = (out + b2_ref[...]).astype(out_ref.dtype)


def model_comparation_forward(bert_out, pic_emb, params, *, tb=None, ts=None):
    """bert_out, pic_emb: (B, S, 768) bf16/f32. Returns (B, C) float32."""
    w1, b1, gamma, beta, w2, b2 = params
    B, S, H = bert_out.shape
    C = w2.shape[1]
    in_itemsize = bert_out.dtype.itemsize

    # |pic_emb|^2 along the sequence axis. The picture embeddings are frozen,
    # so in the real model this is computed once alongside the embeddings.
    ne = jnp.sum(jnp.square(pic_emb.astype(jnp.float32)), axis=1)   # (B, H)

    # ---- tile selection ------------------------------------------------------
    # Target >= ~4 MiB of streamed input per grid step (HBM roofline) while the
    # double-buffered x/e working set stays well inside v7x's 64 MiB VMEM.
    if ts is None:
        ts = min(_round_up(S, SEQ_CHUNK), 512)
    else:
        ts = _round_up(min(ts, _round_up(S, SEQ_CHUNK)), SEQ_CHUNK)

    input_buf_budget = 28 << 20     # double-buffered x/e tiles
    target_step_bytes = 4 << 20     # streamed bytes per grid step
    if tb is None:
        tb = 8
        # keep a few 'parallel' batch steps alive for v7x's 2 TensorCores
        tb_cap = max(8, _round_up(-(-B // 4), 8))
        while (tb * 2 <= tb_cap
               and 2 * tb * ts * H * in_itemsize < target_step_bytes
               and 2 * 2 * (tb * 2) * ts * H * in_itemsize <= input_buf_budget):
            tb *= 2
    tb = max(8, _round_up(tb, 8))

    # ---- padding -------------------------------------------------------------
    # Pad classifier output lane dim to 128 (lane-dense final store).
    c_pad = max(128, _round_up(C, 128))
    w2p = jnp.zeros((w2.shape[0], c_pad), jnp.float32).at[:, :C].set(w2)
    b2p = jnp.zeros((1, c_pad), jnp.float32).at[:, :C].set(b2)

    # Zero-pad batch / sequence to tile multiples (exact for the dot / norm
    # sums; padded batch rows are sliced off below).
    bp = _round_up(B, tb)
    sp = _round_up(S, ts)
    if (bp, sp) != (B, S):
        bert_out = jnp.pad(bert_out, ((0, bp - B), (0, sp - S), (0, 0)))
        pic_emb = jnp.pad(pic_emb, ((0, bp - B), (0, sp - S), (0, 0)))
    if bp != B:
        ne = jnp.pad(ne, ((0, bp - B), (0, 0)))

    grid = (bp // tb, sp // ts)

    # TODO(synk): weight/bias BlockSpecs could use pipeline_mode=pl.Buffered(1)
    # to skip double-buffering ~1 MB of resident weights; omitted to stay on the
    # well-trodden lowering path.
    in_specs = [
        pl.BlockSpec((tb, ts, H), lambda b, s: (b, s, 0)),     # bert_out tile
        pl.BlockSpec((tb, ts, H), lambda b, s: (b, s, 0)),     # pic_emb tile
        pl.BlockSpec((tb, H), lambda b, s: (b, 0)),            # |pic|^2 per batch
        pl.BlockSpec(w1.shape, lambda b, s: (0, 0)),           # weights resident
        pl.BlockSpec(b1.shape, lambda b, s: (0, 0)),
        pl.BlockSpec(gamma.shape, lambda b, s: (0, 0)),
        pl.BlockSpec(beta.shape, lambda b, s: (0, 0)),
        pl.BlockSpec(w2p.shape, lambda b, s: (0, 0)),
        pl.BlockSpec(b2p.shape, lambda b, s: (0, 0)),
    ]
    out_spec = pl.BlockSpec((tb, c_pad), lambda b, s: (b, 0))  # resident over S

    # Explicit scoped-VMEM limit: actual buffer usage + headroom (above v5e's
    # 16 MiB / v6e-v7x's 32 MiB defaults, kept under v7x's 64 MiB physical).
    weights_bytes = (w1.size + b1.size + gamma.size + beta.size
                     + w2p.size + b2p.size) * 4
    buf_bytes = (2 * 2 * tb * ts * H * in_itemsize     # x / e, double-buffered
                 + 2 * tb * H * 4                      # ne
                 + 2 * weights_bytes                   # resident weights (2 bufs)
                 + 2 * tb * c_pad * 4                  # output
                 + 2 * tb * H * 4)                     # scratch accumulators
    vmem_limit = min(max(int(buf_bytes * 1.5) + (4 << 20), 32 << 20), 56 << 20)

    cost = pl.CostEstimate(
        flops=4 * bp * sp * H + 2 * bp * H * MID + 2 * bp * MID * c_pad,
        transcendentals=bp * H + bp,
        bytes_accessed=(2 * bp * sp * H * in_itemsize + weights_bytes
                        + bp * H * 4 + bp * c_pad * 4),
    )

    out = pl.pallas_call(
        _comparation_kernel,
        out_shape=jax.ShapeDtypeStruct((bp, c_pad), jnp.float32),
        grid=grid,
        in_specs=in_specs,
        out_specs=out_spec,
        scratch_shapes=[pltpu.VMEM((tb, H), jnp.float32),
                        pltpu.VMEM((tb, H), jnp.float32)],
        compiler_params=pltpu.CompilerParams(
            dimension_semantics=("parallel", "arbitrary"),
            vmem_limit_bytes=vmem_limit),
        cost_estimate=cost,
    )(bert_out, pic_emb, ne, w1, b1, gamma, beta, w2p, b2p)

    return out[:B, :C]


def init_params(key, hidden=768, mid=MID, num_classes=2):
    """Deterministic init matching the module: Xavier-uniform linears, zero
    biases, LayerNorm gamma=1 / beta=0."""
    k1, k2 = jax.random.split(key)

    def xavier(k, fan_in, fan_out):
        limit = (6.0 / (fan_in + fan_out)) ** 0.5
        return jax.random.uniform(k, (fan_in, fan_out), jnp.float32,
                                  minval=-limit, maxval=limit)

    w1 = xavier(k1, hidden, mid)
    b1 = jnp.zeros((1, mid), jnp.float32)
    gamma = jnp.ones((1, mid), jnp.float32)
    beta = jnp.zeros((1, mid), jnp.float32)
    w2 = xavier(k2, mid, num_classes)
    b2 = jnp.zeros((1, num_classes), jnp.float32)
    return (w1, b1, gamma, beta, w2, b2)


def reference_forward(bert_out, pic_emb, params):
    """Pure-JAX reference (PyTorch ATen cosine_similarity semantics)."""
    w1, b1, gamma, beta, w2, b2 = params
    w12 = jnp.sum(bert_out * pic_emb, axis=1)
    w11 = jnp.sum(bert_out * bert_out, axis=1)
    w22 = jnp.sum(pic_emb * pic_emb, axis=1)
    cos = w12 / jnp.sqrt(jnp.maximum(w11 * w22, COS_EPS * COS_EPS))
    h = cos @ w1 + b1
    mu = jnp.mean(h, axis=-1, keepdims=True)
    var = jnp.mean((h - mu) ** 2, axis=-1, keepdims=True)
    hn = (h - mu) / jnp.sqrt(var + LN_EPS) * gamma + beta
    r = jnp.maximum(hn, 0.0)
    return r @ w2 + b2


if __name__ == "__main__":
    key = jax.random.PRNGKey(0)
    k_x, k_e, k_p = jax.random.split(key, 3)

    B, S, H = 16, 128, 768       # hidden fixed at 768 by the classifier head
    NUM_CLASSES = 2              # task != 'regression'

    # Simulated BERT last_hidden_state and precomputed picture embeddings,
    # streamed as bf16 (memory-bound reduction -> halves HBM traffic; inputs
    # are deliberately bf16-rounded relative to an f32 torch model).
    bert_out = jax.random.normal(k_x, (B, S, H), jnp.float32).astype(jnp.bfloat16)
    pic_emb = jax.random.normal(k_e, (B, S, H), jnp.float32).astype(jnp.bfloat16)

    params = init_params(k_p, hidden=H, mid=MID, num_classes=NUM_CLASSES)

    out = model_comparation_forward(bert_out, pic_emb, params)
    out = jax.block_until_ready(out)

    ref = reference_forward(bert_out.astype(jnp.float32),
                            pic_emb.astype(jnp.float32), params)
    assert out.shape == (B, NUM_CLASSES)
    assert jnp.allclose(out, ref, atol=1e-3, rtol=1e-3), "mismatch vs reference"

    print("KERNEL_OK")
</pallas_src>

<mosaic_0001>
module attributes {stable_mosaic.version = 11 : i64} {
  func.func @_comparation_kernel(%arg0: i32, %arg1: i32, %arg2: memref<8x128x768xbf16, #tpu.memory_space<vmem>>, %arg3: memref<8x128x768xbf16, #tpu.memory_space<vmem>>, %arg4: memref<8x768xf32, #tpu.memory_space<vmem>>, %arg5: memref<768x256xf32, #tpu.memory_space<vmem>>, %arg6: memref<1x256xf32, #tpu.memory_space<vmem>>, %arg7: memref<1x256xf32, #tpu.memory_space<vmem>>, %arg8: memref<1x256xf32, #tpu.memory_space<vmem>>, %arg9: memref<256x128xf32, #tpu.memory_space<vmem>>, %arg10: memref<1x128xf32, #tpu.memory_space<vmem>>, %arg11: memref<8x128xf32, #tpu.memory_space<vmem>>, %arg12: memref<8x768xf32, #tpu.memory_space<vmem>>, %arg13: memref<8x768xf32, #tpu.memory_space<vmem>>) attributes {dimension_semantics = [#tpu.dimension_semantics<parallel>, #tpu.dimension_semantics<arbitrary>], iteration_bounds = array<i64: 2, 1>, scalar_prefetch = 0 : i64, scratch_operands = 2 : i64, tpu.core_type = #tpu.core_type<tc>, window_params = [{transform_indices = @transform_0, window_bounds = array<i64: 8, 128, 768>}, {transform_indices = @transform_1, window_bounds = array<i64: 8, 128, 768>}, {transform_indices = @transform_2, window_bounds = array<i64: 8, 768>}, {pipeline_mode = #tpu.pipeline_mode<synchronous>, transform_indices = @transform_3, window_bounds = array<i64: 768, 256>}, {pipeline_mode = #tpu.pipeline_mode<synchronous>, transform_indices = @transform_4, window_bounds = array<i64: 1, 256>}, {pipeline_mode = #tpu.pipeline_mode<synchronous>, transform_indices = @transform_5, window_bounds = array<i64: 1, 256>}, {pipeline_mode = #tpu.pipeline_mode<synchronous>, transform_indices = @transform_6, window_bounds = array<i64: 1, 256>}, {pipeline_mode = #tpu.pipeline_mode<synchronous>, transform_indices = @transform_7, window_bounds = array<i64: 256, 128>}, {pipeline_mode = #tpu.pipeline_mode<synchronous>, transform_indices = @transform_8, window_bounds = array<i64: 1, 128>}, {transform_indices = @transform_9, window_bounds = array<i64: 8, 128>}]} {
    %c0_i32 = arith.constant 0 : i32
    %0 = arith.cmpi eq, %arg1, %c0_i32 : i32
    %1 = arith.extui %0 : i1 to i32
    %c0_i32_0 = arith.constant 0 : i32
    %2 = arith.cmpi ne, %1, %c0_i32_0 : i32
    scf.if %2 {
      %cst = arith.constant 0.000000e+00 : f32
      %7 = vector.broadcast %cst : f32 to vector<8x768xf32>
      %c0 = arith.constant 0 : index
      %c0_5 = arith.constant 0 : index
      %8 = vector.load %arg12[%c0, %c0_5] : memref<8x768xf32, #tpu.memory_space<vmem>>, vector<8x768xf32>
      tpu.vector_store %arg12[%c0, %c0_5], %7 {strides = array<i32>} : memref<8x768xf32, #tpu.memory_space<vmem>>, vector<8x768xf32>,
      %cst_6 = arith.constant 0.000000e+00 : f32
      %9 = vector.broadcast %cst_6 : f32 to vector<8x768xf32>
      %c0_7 = arith.constant 0 : index
      %c0_8 = arith.constant 0 : index
      %10 = vector.load %arg13[%c0_7, %c0_8] : memref<8x768xf32, #tpu.memory_space<vmem>>, vector<8x768xf32>
      tpu.vector_store %arg13[%c0_7, %c0_8], %9 {strides = array<i32>} : memref<8x768xf32, #tpu.memory_space<vmem>>, vector<8x768xf32>,
    } else {
    }
    %c0_i32_1 = arith.constant 0 : i32
    %c8_i32 = arith.constant 8 : i32
    %3 = arith.addi %c0_i32_1, %c8_i32 : i32
    %c1_i32 = arith.constant 1 : i32
    scf.for %arg14 = %c0_i32_1 to %3 step %c1_i32  : i32 {
      %c1_i32_5 = arith.constant 1 : i32
      %7 = arith.muli %arg14, %c1_i32_5 : i32
      %c0_i32_6 = arith.constant 0 : i32
      %8 = arith.addi %c0_i32_6, %7 : i32
      %c16_i32 = arith.constant 16 : i32
      %9 = arith.muli %8, %c16_i32 : i32
      %10 = tpu.assume_multiple %9, 16 : i32
      %c0 = arith.constant 0 : index
      %11 = arith.index_cast %10 : i32 to index
      %c0_7 = arith.constant 0 : index
      %12 = vector.load %arg2[%c0, %11, %c0_7] : memref<8x128x768xbf16, #tpu.memory_space<vmem>>, vector<8x16x768xbf16>
      %13 = arith.extf %12 : vector<8x16x768xbf16> to vector<8x16x768xf32>
      %c0_8 = arith.constant 0 : index
      %14 = arith.index_cast %10 : i32 to index
      %c0_9 = arith.constant 0 : index
      %15 = vector.load %arg3[%c0_8, %14, %c0_9] : memref<8x128x768xbf16, #tpu.memory_space<vmem>>, vector<8x16x768xbf16>
      %16 = arith.extf %15 : vector<8x16x768xbf16> to vector<8x16x768xf32>
      %c0_10 = arith.constant 0 : index
      %c0_11 = arith.constant 0 : index
      %17 = vector.load %arg12[%c0_10, %c0_11] : memref<8x768xf32, #tpu.memory_space<vmem>>, vector<8x768xf32>
      %18 = arith.mulf %13, %16 : vector<8x16x768xf32>
      %cst = arith.constant dense<0.000000e+00> : vector<8x768xf32>
      %19 = vector.multi_reduction <add>, %18, %cst [1] : vector<8x16x768xf32> to vector<8x768xf32>
      %20 = arith.addf %17, %19 : vector<8x768xf32>
      %c0_12 = arith.constant 0 : index
      %c0_13 = arith.constant 0 : index
      %21 = vector.load %arg12[%c0_12, %c0_13] : memref<8x768xf32, #tpu.memory_space<vmem>>, vector<8x768xf32>
      tpu.vector_store %arg12[%c0_12, %c0_13], %20 {strides = array<i32>} : memref<8x768xf32, #tpu.memory_space<vmem>>, vector<8x768xf32>,
      %c0_14 = arith.constant 0 : index
      %c0_15 = arith.constant 0 : index
      %22 = vector.load %arg13[%c0_14, %c0_15] : memref<8x768xf32, #tpu.memory_space<vmem>>, vector<8x768xf32>
      %23 = arith.mulf %13, %13 : vector<8x16x768xf32>
      %cst_16 = arith.constant dense<0.000000e+00> : vector<8x768xf32>
      %24 = vector.multi_reduction <add>, %23, %cst_16 [1] : vector<8x16x768xf32> to vector<8x768xf32>
      %25 = arith.addf %22, %24 : vector<8x768xf32>
      %c0_17 = arith.constant 0 : index
      %c0_18 = arith.constant 0 : index
      %26 = vector.load %arg13[%c0_17, %c0_18] : memref<8x768xf32, #tpu.memory_space<vmem>>, vector<8x768xf32>
      tpu.vector_store %arg13[%c0_17, %c0_18], %25 {strides = array<i32>} : memref<8x768xf32, #tpu.memory_space<vmem>>, vector<8x768xf32>,
    }
    %c8_i32_2 = arith.constant 8 : i32
    %c0_i32_3 = arith.constant 0 : i32
    %4 = arith.cmpi eq, %arg1, %c0_i32_3 : i32
    %5 = arith.extui %4 : i1 to i32
    %c0_i32_4 = arith.constant 0 : i32
    %6 = arith.cmpi ne, %5, %c0_i32_4 : i32
    scf.if %6 {
      %c0 = arith.constant 0 : index
      %c0_5 = arith.constant 0 : index
      %7 = vector.load %arg13[%c0, %c0_5] : memref<8x768xf32, #tpu.memory_space<vmem>>, vector<8x768xf32>
      %c0_6 = arith.constant 0 : index
      %c0_7 = arith.constant 0 : index
      %8 = vector.load %arg4[%c0_6, %c0_7] : memref<8x768xf32, #tpu.memory_space<vmem>>, vector<8x768xf32>
      %9 = arith.mulf %7, %8 : vector<8x768xf32>
      %cst = arith.constant 9.99999996E-13 : f32
      %10 = vector.broadcast %cst : f32 to vector<8x768xf32>
      %11 = arith.maximumf %9, %10 : vector<8x768xf32>
      %c0_8 = arith.constant 0 : index
      %c0_9 = arith.constant 0 : index
      %12 = vector.load %arg12[%c0_8, %c0_9] : memref<8x768xf32, #tpu.memory_space<vmem>>, vector<8x768xf32>
      %13 = math.rsqrt %11 : vector<8x768xf32>
      %14 = arith.mulf %12, %13 : vector<8x768xf32>
      %c0_10 = arith.constant 0 : index
      %c0_11 = arith.constant 0 : index
      %15 = vector.load %arg5[%c0_10, %c0_11] : memref<768x256xf32, #tpu.memory_space<vmem>>, vector<768x256xf32>
      %cst_12 = arith.constant dense<0.000000e+00> : vector<8x256xf32>
      %16 = tpu.matmul %14, %15, %cst_12 {dimension_numbers = #tpu.dot_dimension_numbers<[1], [0], [0], [1], [0, 0, 1, 1], [], []>} : vector<8x768xf32>, vector<768x256xf32>, vector<8x256xf32> -> vector<8x256xf32>
      %c0_13 = arith.constant 0 : index
      %c0_14 = arith.constant 0 : index
      %17 = vector.load %arg6[%c0_13, %c0_14] : memref<1x256xf32, #tpu.memory_space<vmem>>, vector<1x256xf32>
      %18 = vector.broadcast %17 : vector<1x256xf32> to vector<8x256xf32>
      %19 = arith.addf %16, %18 : vector<8x256xf32>
      %cst_15 = arith.constant dense<0.000000e+00> : vector<8xf32>
      %20 = vector.multi_reduction <add>, %19, %cst_15 [1] : vector<8x256xf32> to vector<8xf32>
      %21 = vector.shape_cast %20 : vector<8xf32> to vector<8x1xf32>
      %cst_16 = arith.constant 2.560000e+02 : f32
      %22 = vector.broadcast %cst_16 : f32 to vector<8x1xf32>
      %23 = arith.divf %21, %22 : vector<8x1xf32>
      %24 = vector.broadcast %23 : vector<8x1xf32> to vector<8x256xf32>
      %25 = arith.subf %19, %24 : vector<8x256xf32>
      %26 = vector.broadcast %23 : vector<8x1xf32> to vector<8x256xf32>
      %27 = arith.subf %19, %26 : vector<8x256xf32>
      %28 = arith.mulf %25, %27 : vector<8x256xf32>
      %cst_17 = arith.constant dense<0.000000e+00> : vector<8xf32>
      %29 = vector.multi_reduction <add>, %28, %cst_17 [1] : vector<8x256xf32> to vector<8xf32>
      %30 = vector.shape_cast %29 : vector<8xf32> to vector<8x1xf32>
      %cst_18 = arith.constant 2.560000e+02 : f32
      %31 = vector.broadcast %cst_18 : f32 to vector<8x1xf32>
      %32 = arith.divf %30, %31 : vector<8x1xf32>
      %33 = vector.broadcast %23 : vector<8x1xf32> to vector<8x256xf32>
      %34 = arith.subf %19, %33 : vector<8x256xf32>
      %cst_19 = arith.constant 9.99999974E-6 : f32
      %35 = vector.broadcast %cst_19 : f32 to vector<8x1xf32>
      %36 = arith.addf %32, %35 : vector<8x1xf32>
      %37 = math.rsqrt %36 : vector<8x1xf32>
      %38 = vector.broadcast %37 : vector<8x1xf32> to vector<8x256xf32>
      %39 = arith.mulf %34, %38 : vector<8x256xf32>
      %c0_20 = arith.constant 0 : index
      %c0_21 = arith.constant 0 : index
      %40 = vector.load %arg7[%c0_20, %c0_21] : memref<1x256xf32, #tpu.memory_space<vmem>>, vector<1x256xf32>
      %41 = vector.broadcast %40 : vector<1x256xf32> to vector<8x256xf32>
      %42 = arith.mulf %39, %41 : vector<8x256xf32>
      %c0_22 = arith.constant 0 : index
      %c0_23 = arith.constant 0 : index
      %43 = vector.load %arg8[%c0_22, %c0_23] : memref<1x256xf32, #tpu.memory_space<vmem>>, vector<1x256xf32>
      %44 = vector.broadcast %43 : vector<1x256xf32> to vector<8x256xf32>
      %45 = arith.addf %42, %44 : vector<8x256xf32>
      %cst_24 = arith.constant 0.000000e+00 : f32
      %46 = vector.broadcast %cst_24 : f32 to vector<8x256xf32>
      %47 = arith.maximumf %45, %46 : vector<8x256xf32>
      %c0_25 = arith.constant 0 : index
      %c0_26 = arith.constant 0 : index
      %48 = vector.load %arg9[%c0_25, %c0_26] : memref<256x128xf32, #tpu.memory_space<vmem>>, vector<256x128xf32>
      %cst_27 = arith.constant dense<0.000000e+00> : vector<8x128xf32>
      %49 = tpu.matmul %47, %48, %cst_27 {dimension_numbers = #tpu.dot_dimension_numbers<[1], [0], [0], [1], [0, 0, 1, 1], [], []>} : vector<8x256xf32>, vector<256x128xf32>, vector<8x128xf32> -> vector<8x128xf32>
      %c0_28 = arith.constant 0 : index
      %c0_29 = arith.constant 0 : index
      %50 = vector.load %arg10[%c0_28, %c0_29] : memref<1x128xf32, #tpu.memory_space<vmem>>, vector<1x128xf32>
      %51 = vector.broadcast %50 : vector<1x128xf32> to vector<8x128xf32>
      %52 = arith.addf %49, %51 : vector<8x128xf32>
      %c0_30 = arith.constant 0 : index
      %c0_31 = arith.constant 0 : index
      %53 = vector.load %arg11[%c0_30, %c0_31] : memref<8x128xf32, #tpu.memory_space<vmem>>, vector<8x128xf32>
      tpu.vector_store %arg11[%c0_30, %c0_31], %52 {strides = array<i32>} : memref<8x128xf32, #tpu.memory_space<vmem>>, vector<8x128xf32>,
    } else {
    }
    return
  }
  func.func @transform_0(%arg0: i32, %arg1: i32) -> (i32, i32, i32) {
    %c0_i32 = arith.constant 0 : i32
    %c0_i32_0 = arith.constant 0 : i32
    return %arg0, %arg1, %c0_i32 : i32, i32, i32
  }
  func.func @transform_1(%arg0: i32, %arg1: i32) -> (i32, i32, i32) {
    %c0_i32 = arith.constant 0 : i32
    %c0_i32_0 = arith.constant 0 : i32
    return %arg0, %arg1, %c0_i32 : i32, i32, i32
  }
  func.func @transform_2(%arg0: i32, %arg1: i32) -> (i32, i32) {
    %c0_i32 = arith.constant 0 : i32
    %c0_i32_0 = arith.constant 0 : i32
    return %arg0, %c0_i32 : i32, i32
  }
  func.func @transform_3(%arg0: i32, %arg1: i32) -> (i32, i32) {
    %c0_i32 = arith.constant 0 : i32
    %c0_i32_0 = arith.constant 0 : i32
    %c0_i32_1 = arith.constant 0 : i32
    return %c0_i32, %c0_i32_0 : i32, i32
  }
  func.func @transform_4(%arg0: i32, %arg1: i32) -> (i32, i32) {
    %c0_i32 = arith.constant 0 : i32
    %c0_i32_0 = arith.constant 0 : i32
    %c0_i32_1 = arith.constant 0 : i32
    return %c0_i32, %c0_i32_0 : i32, i32
  }
  func.func @transform_5(%arg0: i32, %arg1: i32) -> (i32, i32) {
    %c0_i32 = arith.constant 0 : i32
    %c0_i32_0 = arith.constant 0 : i32
    %c0_i32_1 = arith.constant 0 : i32
    return %c0_i32, %c0_i32_0 : i32, i32
  }
  func.func @transform_6(%arg0: i32, %arg1: i32) -> (i32, i32) {
    %c0_i32 = arith.constant 0 : i32
    %c0_i32_0 = arith.constant 0 : i32
    %c0_i32_1 = arith.constant 0 : i32
    return %c0_i32, %c0_i32_0 : i32, i32
  }
  func.func @transform_7(%arg0: i32, %arg1: i32) -> (i32, i32) {
    %c0_i32 = arith.constant 0 : i32
    %c0_i32_0 = arith.constant 0 : i32
    %c0_i32_1 = arith.constant 0 : i32
    return %c0_i32, %c0_i32_0 : i32, i32
  }
  func.func @transform_8(%arg0: i32, %arg1: i32) -> (i32, i32) {
    %c0_i32 = arith.constant 0 : i32
    %c0_i32_0 = arith.constant 0 : i32
    %c0_i32_1 = arith.constant 0 : i32
    return %c0_i32, %c0_i32_0 : i32, i32
  }
  func.func @transform_9(%arg0: i32, %arg1: i32) -> (i32, i32) {
    %c0_i32 = arith.constant 0 : i32
    %c0_i32_0 = arith.constant 0 : i32
    return %arg0, %c0_i32 : i32, i32
  }
}

</mosaic_0001>

<llo_original>
// kernel: tpu_custom_call.1
$region0: #{tpu_custom_call.1}
  #allocation0 [shape = 'u32[]', space=smem, size = 0x4, offset = 0x4, fixed_abs, tag = 'smem constant byte address 0x4 - core index']
  #allocation1 [shape = 'u32[144,128]{1,0:T(1,128)}', space=vmem, size = 0x12000, scoped, tag = 'internal scratch']
  #allocation2 [shape = 'f32[8,768]{1,0:T(8,128)}', space=vmem, size = 0x6000, scoped, tag = 'scratch operand']
  #allocation3 [shape = 'f32[8,768]{1,0:T(8,128)}', space=vmem, size = 0x6000, scoped, tag = 'scratch operand']
  %s0 = inlined_call_operand.hbm [shape: bf16[16,128,768], index: 0, kind: input, shape index: {}]
  %s1 = inlined_call_operand.hbm [shape: bf16[16,128,768], index: 1, kind: input, shape index: {}]
  %s2 = inlined_call_operand.hbm [shape: f32[16,768], index: 2, kind: input, shape index: {}]
  %s3 = inlined_call_operand.hbm [shape: f32[768,256], index: 3, kind: input, shape index: {}]
  %s4 = inlined_call_operand.hbm [shape: f32[1,256], index: 4, kind: input, shape index: {}]
  %s5 = inlined_call_operand.hbm [shape: f32[1,256], index: 5, kind: input, shape index: {}]
  %s6 = inlined_call_operand.hbm [shape: f32[1,256], index: 6, kind: input, shape index: {}]
  %s7 = inlined_call_operand.hbm [shape: f32[256,128], index: 7, kind: input, shape index: {}]
  %s8 = inlined_call_operand.hbm [shape: f32[1,128], index: 8, kind: input, shape index: {}]
  %s9 = inlined_call_operand.hbm [shape: f32[16,128], index: 9, kind: output, shape index: {}]
  %s10 = sld [smem:[#allocation0]]
  $region120: #{tpu_custom_call.1} parent=0
    _
  %s12 = ssub.s32 1, %s10
  %s13 = scalar_select 0, %s12, %s10
  $region1: #{tpu_custom_call.1} parent=0
    #allocation4 [shape = 'u8[3145728]{0}', space=vmem, size = 0x300000, scoped, tag = 'input window, operand 0']
    #allocation5 [shape = 's32[2]{0}', space=sflag, size = 0x8, scoped, tag = 'scoped memory for tpu_custom_call.1']
    #allocation6 [shape = 's32[2]{0}', space=sflag, size = 0x8, scoped, tag = 'scoped memory for tpu_custom_call.1']
    #allocation7 [shape = 'u8[3145728]{0}', space=vmem, size = 0x300000, scoped, tag = 'input window, operand 1']
    #allocation8 [shape = 's32[2]{0}', space=sflag, size = 0x8, scoped, tag = 'scoped memory for tpu_custom_call.1']
    #allocation9 [shape = 'u8[49152]{0}', space=vmem, size = 0xc000, scoped, tag = 'input window, operand 2']
    #allocation10 [shape = 'u8[786432]{0}', space=vmem, size = 0xc0000, scoped, tag = 'input window, operand 3, single buffered']
    #allocation11 [shape = 's32[1]{0}', space=sflag, size = 0x4, scoped, tag = 'scoped memory for tpu_custom_call.1']
    #allocation12 [shape = 'u8[1024]{0}', space=vmem, size = 0x400, scoped, tag = 'input window, operand 4, single buffered']
    #allocation13 [shape = 'u8[1024]{0}', space=vmem, size = 0x400, scoped, tag = 'input window, operand 5, single buffered']
    #allocation14 [shape = 's32[1]{0}', space=sflag, size = 0x4, scoped, tag = 'scoped memory for tpu_custom_call.1']
    #allocation15 [shape = 'u8[1024]{0}', space=vmem, size = 0x400, scoped, tag = 'input window, operand 6, single buffered']
    #allocation16 [shape = 'u8[131072]{0}', space=vmem, size = 0x20000, scoped, tag = 'input window, operand 7, single buffered']
    #allocation17 [shape = 's32[1]{0}', space=sflag, size = 0x4, scoped, tag = 'scoped memory for tpu_custom_call.1']
    #allocation18 [shape = 'u8[512]{0}', space=vmem, size = 0x400, scoped, tag = 'input window, operand 8, single buffered']
    #allocation19 [shape = 'u8[8192]{0}', space=vmem, size = 0x2000, scoped, tag = 'output window, operand 0']
    %14 = vsyncpa [#allocation5], 0
    %s15 = scalar_lea.sflag [#allocation5], 1
    %16 = vsyncpa %s15, 0
    %17 = vsyncpa [#allocation8], 0
    %s18 = scalar_lea.sflag [#allocation8], 1
    %19 = vsyncpa %s18, 0
    %20 = vsyncpa [#allocation11], 0
    %21 = vsyncpa [#allocation14], 0
    %22 = vsyncpa [#allocation17], 0
    %23 = vsyncpa [#allocation6], 0
    %s24 = scalar_lea.sflag [#allocation6], 1
    %25 = vsyncpa %s24, 0
    loop: start=0, step=1, limit=4
    $region2: #{tpu_custom_call.1} parent=1 // loop_pre_header
      _
    $region3: #{tpu_custom_call.1} parent=1 // loop_header
      %s27 = sphi 0, %s31
      %p28 = scmp.ge.s32.totalorder %s27, 4
      %s34 = sphi 0, %s46
      %s35 = sphi 0, %s42
      %s36 = sphi 0, %s34
      %s37 = sphi 0, %s35
      %s38 = sphi 0, %s36
      %s39 = sphi 0, %s37
      %s51 = sphi 0, %s53
      %s54 = sphi 0, %s51
      %s55 = sphi 0, %s54
      %s71 = sphi 0, %s55
      %s79 = sphi 0, %s81
      %s82 = sphi 0, %s79
      %s83 = sphi 0, %s82
      %s99 = sphi 0, %s83
      %s105 = sphi 0, %s107
      %s108 = sphi 0, %s105
      %s109 = sphi 0, %s108
      %s125 = sphi 0, %s109
      %s129 = sphi 0, %s129
      %s131 = sphi 0, %s129
      %s132 = sphi 0, %s131
      %s146 = sphi 0, %s132
      %s150 = sphi 0, %s150
      %s152 = sphi 0, %s150
      %s153 = sphi 0, %s152
      %s167 = sphi 0, %s153
      %s171 = sphi 0, %s171
      %s173 = sphi 0, %s171
      %s174 = sphi 0, %s173
      %s188 = sphi 0, %s174
      %s192 = sphi 0, %s192
      %s194 = sphi 0, %s192
      %s195 = sphi 0, %s194
      %s209 = sphi 0, %s195
      %s213 = sphi 0, %s213
      %s215 = sphi 0, %s213
      %s216 = sphi 0, %s215
      %s230 = sphi 0, %s216
      %s234 = sphi 0, %s234
      %s236 = sphi 0, %s234
      %s237 = sphi 0, %s236
      %s251 = sphi 0, %s237
      %s257 = sphi 0, %s259
      %s260 = sphi 0, %s257
      %s261 = sphi 0, %s260
      %s277 = sphi 0, %s261
    $region4: #{tpu_custom_call.1} parent=1 // loop_header_branch
      %30 = sbr.rel (%p28) target = $region8
    $region5: #{tpu_custom_call.1} parent=1 // loop_body
      %s32 = ssub.s32 %s27, 1
      %s33 = ssub.s32 %s27, 2
      %s40 = sadd.s32 1, %s35
      %p41 = scmp.ge.s32.totalorder %s40, 1
      %s42 = scalar_select %p41, 0, %s40
      %s43 = sadd.s32 1, %s34
      %s44 = scalar_select %p41, %s43, %s34
      %p45 = scmp.ge.s32.totalorder %s44, 2
      %s46 = scalar_select %p45, 0, %s44
      %s47 = ssub.s32 %s34, %s46
      %s48 = ssub.s32 %s35, %s42
      %s49 = sor.u32 %s47, %s48
      %p50 = scmp.eq.s32.totalorder %s49, 0
      %s52 = sadd.s32 %s51, 1
      %s53 = scalar_select %p50, %s51, %s52
      %p56 = pneg %p50
      %p57 = scmp.eq.s32.totalorder %s27, 1
      %p58 = por %p56, %p57
      %p59 = scmp.ne.s32.totalorder %s51, %s54
      %p60 = scmp.eq.s32.totalorder %s27, 0
      %p61 = por %p59, %p60
      %p62 = scmp.ne.s32.totalorder %s51, %s54
      %p63 = scmp.eq.s32.totalorder %s32, 1
      %p64 = por %p62, %p63
      %p65 = scmp.ne.s32.totalorder %s54, %s55
      %p66 = scmp.eq.s32.totalorder %s32, 0
      %p67 = por %p65, %p66
      %p68 = scmp.ne.s32.totalorder %s54, %s55
      %p69 = scmp.eq.s32.totalorder %s33, 1
      %p70 = por %p68, %p69
      %p72 = scmp.ne.s32.totalorder %s55, %s71
      %p73 = scmp.eq.s32.totalorder %s33, 0
      %p74 = por %p72, %p73
      %s75 = ssub.s32 %s34, %s46
      %s76 = ssub.s32 %s35, %s42
      %s77 = sor.u32 %s75, %s76
      %p78 = scmp.eq.s32.totalorder %s77, 0
      %s80 = sadd.s32 %s79, 1
      %s81 = scalar_select %p78, %s79, %s80
      %p84 = pneg %p78
      %p85 = scmp.eq.s32.totalorder %s27, 1
      %p86 = por %p84, %p85
      %p87 = scmp.ne.s32.totalorder %s79, %s82
      %p88 = scmp.eq.s32.totalorder %s27, 0
      %p89 = por %p87, %p88
      %p90 = scmp.ne.s32.totalorder %s79, %s82
      %p91 = scmp.eq.s32.totalorder %s32, 1
      %p92 = por %p90, %p91
      %p93 = scmp.ne.s32.totalorder %s82, %s83
      %p94 = scmp.eq.s32.totalorder %s32, 0
      %p95 = por %p93, %p94
      %p96 = scmp.ne.s32.totalorder %s82, %s83
      %p97 = scmp.eq.s32.totalorder %s33, 1
      %p98 = por %p96, %p97
      %p100 = scmp.ne.s32.totalorder %s83, %s99
      %p101 = scmp.eq.s32.totalorder %s33, 0
      %p102 = por %p100, %p101
      %s103 = ssub.s32 %s34, %s46
      %p104 = scmp.eq.s32.totalorder %s103, 0
      %s106 = sadd.s32 %s105, 1
      %s107 = scalar_select %p104, %s105, %s106
      %p110 = pneg %p104
      %p111 = scmp.eq.s32.totalorder %s27, 1
      %p112 = por %p110, %p111
      %p113 = scmp.ne.s32.totalorder %s105, %s108
      %p114 = scmp.eq.s32.totalorder %s27, 0
      %p115 = por %p113, %p114
      %p116 = scmp.ne.s32.totalorder %s105, %s108
      %p117 = scmp.eq.s32.totalorder %s32, 1
      %p118 = por %p116, %p117
      %p119 = scmp.ne.s32.totalorder %s108, %s109
      %p120 = scmp.eq.s32.totalorder %s32, 0
      %p121 = por %p119, %p120
      %p122 = scmp.ne.s32.totalorder %s108, %s109
      %p123 = scmp.eq.s32.totalorder %s33, 1
      %p124 = por %p122, %p123
      %p126 = scmp.ne.s32.totalorder %s109, %s125
      %p127 = scmp.eq.s32.totalorder %s33, 0
      %p128 = por %p126, %p127
      %s130 = sadd.s32 %s129, 1
      %p133 = scmp.eq.s32.totalorder %s27, 1
      %p134 = scmp.ne.s32.totalorder %s129, %s131
      %p135 = scmp.eq.s32.totalorder %s27, 0
      %p136 = por %p134, %p135
      %p137 = scmp.ne.s32.totalorder %s129, %s131
      %p138 = scmp.eq.s32.totalorder %s32, 1
      %p139 = por %p137, %p138
      %p140 = scmp.ne.s32.totalorder %s131, %s132
      %p141 = scmp.eq.s32.totalorder %s32, 0
      %p142 = por %p140, %p141
      %p143 = scmp.ne.s32.totalorder %s131, %s132
      %p144 = scmp.eq.s32.totalorder %s33, 1
      %p145 = por %p143, %p144
      %p147 = scmp.ne.s32.totalorder %s132, %s146
      %p148 = scmp.eq.s32.totalorder %s33, 0
      %p149 = por %p147, %p148
      %s151 = sadd.s32 %s150, 1
      %p154 = scmp.eq.s32.totalorder %s27, 1
      %p155 = scmp.ne.s32.totalorder %s150, %s152
      %p156 = scmp.eq.s32.totalorder %s27, 0
      %p157 = por %p155, %p156
      %p158 = scmp.ne.s32.totalorder %s150, %s152
      %p159 = scmp.eq.s32.totalorder %s32, 1
      %p160 = por %p158, %p159
      %p161 = scmp.ne.s32.totalorder %s152, %s153
      %p162 = scmp.eq.s32.totalorder %s32, 0
      %p163 = por %p161, %p162
      %p164 = scmp.ne.s32.totalorder %s152, %s153
      %p165 = scmp.eq.s32.totalorder %s33, 1
      %p166 = por %p164, %p165
      %p168 = scmp.ne.s32.totalorder %s153, %s167
      %p169 = scmp.eq.s32.totalorder %s33, 0
      %p170 = por %p168, %p169
      %s172 = sadd.s32 %s171, 1
      %p175 = scmp.eq.s32.totalorder %s27, 1
      %p176 = scmp.ne.s32.totalorder %s171, %s173
      %p177 = scmp.eq.s32.totalorder %s27, 0
      %p178 = por %p176, %p177
      %p179 = scmp.ne.s32.totalorder %s171, %s173
      %p180 = scmp.eq.s32.totalorder %s32, 1
      %p181 = por %p179, %p180
      %p182 = scmp.ne.s32.totalorder %s173, %s174
      %p183 = scmp.eq.s32.totalorder %s32, 0
      %p184 = por %p182, %p183
      %p185 = scmp.ne.s32.totalorder %s173, %s174
      %p186 = scmp.eq.s32.totalorder %s33, 1
      %p187 = por %p185, %p186
      %p189 = scmp.ne.s32.totalorder %s174, %s188
      %p190 = scmp.eq.s32.totalorder %s33, 0
      %p191 = por %p189, %p190
      %s193 = sadd.s32 %s192, 1
      %p196 = scmp.eq.s32.totalorder %s27, 1
      %p197 = scmp.ne.s32.totalorder %s192, %s194
      %p198 = scmp.eq.s32.totalorder %s27, 0
      %p199 = por %p197, %p198
      %p200 = scmp.ne.s32.totalorder %s192, %s194
      %p201 = scmp.eq.s32.totalorder %s32, 1
      %p202 = por %p200, %p201
      %p203 = scmp.ne.s32.totalorder %s194, %s195
      %p204 = scmp.eq.s32.totalorder %s32, 0
      %p205 = por %p203, %p204
      %p206 = scmp.ne.s32.totalorder %s194, %s195
      %p207 = scmp.eq.s32.totalorder %s33, 1
      %p208 = por %p206, %p207
      %p210 = scmp.ne.s32.totalorder %s195, %s209
      %p211 = scmp.eq.s32.totalorder %s33, 0
      %p212 = por %p210, %p211
      %s214 = sadd.s32 %s213, 1
      %p217 = scmp.eq.s32.totalorder %s27, 1
      %p218 = scmp.ne.s32.totalorder %s213, %s215
      %p219 = scmp.eq.s32.totalorder %s27, 0
      %p220 = por %p218, %p219
      %p221 = scmp.ne.s32.totalorder %s213, %s215
      %p222 = scmp.eq.s32.totalorder %s32, 1
      %p223 = por %p221, %p222
      %p224 = scmp.ne.s32.totalorder %s215, %s216
      %p225 = scmp.eq.s32.totalorder %s32, 0
      %p226 = por %p224, %p225
      %p227 = scmp.ne.s32.totalorder %s215, %s216
      %p228 = scmp.eq.s32.totalorder %s33, 1
      %p229 = por %p227, %p228
      %p231 = scmp.ne.s32.totalorder %s216, %s230
      %p232 = scmp.eq.s32.totalorder %s33, 0
      %p233 = por %p231, %p232
      %s235 = sadd.s32 %s234, 1
      %p238 = scmp.eq.s32.totalorder %s27, 1
      %p239 = scmp.ne.s32.totalorder %s234, %s236
      %p240 = scmp.eq.s32.totalorder %s27, 0
      %p241 = por %p239, %p240
      %p242 = scmp.ne.s32.totalorder %s234, %s236
      %p243 = scmp.eq.s32.totalorder %s32, 1
      %p244 = por %p242, %p243
      %p245 = scmp.ne.s32.totalorder %s236, %s237
      %p246 = scmp.eq.s32.totalorder %s32, 0
      %p247 = por %p245, %p246
      %p248 = scmp.ne.s32.totalorder %s236, %s237
      %p249 = scmp.eq.s32.totalorder %s33, 1
      %p250 = por %p248, %p249
      %p252 = scmp.ne.s32.totalorder %s237, %s251
      %p253 = scmp.eq.s32.totalorder %s33, 0
      %p254 = por %p252, %p253
      %s255 = ssub.s32 %s34, %s46
      %p256 = scmp.eq.s32.totalorder %s255, 0
      %s258 = sadd.s32 %s257, 1
      %s259 = scalar_select %p256, %s257, %s258
      %p262 = pneg %p256
      %p263 = scmp.eq.s32.totalorder %s27, 1
      %p264 = por %p262, %p263
      %p265 = scmp.ne.s32.totalorder %s257, %s260
      %p266 = scmp.eq.s32.totalorder %s27, 0
      %p267 = por %p265, %p266
      %p268 = scmp.ne.s32.totalorder %s257, %s260
      %p269 = scmp.eq.s32.totalorder %s32, 1
      %p270 = por %p268, %p269
      %p271 = scmp.ne.s32.totalorder %s260, %s261
      %p272 = scmp.eq.s32.totalorder %s32, 0
      %p273 = por %p271, %p272
      %p274 = scmp.ne.s32.totalorder %s260, %s261
      %p275 = scmp.eq.s32.totalorder %s33, 1
      %p276 = por %p274, %p275
      %p278 = scmp.ne.s32.totalorder %s261, %s277
      %p279 = scmp.eq.s32.totalorder %s33, 0
      %p280 = por %p278, %p279
      %p281 = scmp.le.s32.totalorder 1, %s27
      %p282 = scmp.lt.s32.totalorder %s27, 3
      %p283 = pnand %p281, %p282
      %p284 = pneg %p283
      // Predicated region
      $region9: #{tpu_custom_call.1} parent=5 // pred_check
        _
      $region10: #{tpu_custom_call.1} parent=5 // pred_check_branch
        %286 = sbr.rel (%p283) target = $region12
      $region11: #{tpu_custom_call.1} parent=5 // pred_region
        %s287 = ssub.s32 %s27, 1
        // Predicated region
        $region13: #{tpu_custom_call.1} parent=11 // pred_check
          %p288 = pneg %p142
        $region14: #{tpu_custom_call.1} parent=11 // pred_check_branch
          %290 = sbr.rel (%p288) target = $region16
        $region15: #{tpu_custom_call.1} parent=11 // pred_region
          %s292 = ssub.s32 24576, 24576
          %293 = vsyncadd [#allocation11], %s292
          %s294 = sshll.u32 [#allocation10], 4
          %s295 = int_to_ptr.vmem [resolvable:$true] %s294
          %300 = dma.hbm_to_vmem [thread:$0]  %s3, 24576, %s295, [#allocation11], 256, 256, 16
        $region16: #{tpu_custom_call.1} parent=11 // pred_fallthru
          _
        // Predicated region
        $region17: #{tpu_custom_call.1} parent=11 // pred_check
          %p301 = pneg %p163
        $region18: #{tpu_custom_call.1} parent=11 // pred_check_branch
          %303 = sbr.rel (%p301) target = $region20
        $region19: #{tpu_custom_call.1} parent=11 // pred_region
          %s305 = ssub.s32 32, 32
          %306 = vsyncadd [#allocation11], %s305
          %s308 = sshll.u32 [#allocation12], 4
          %s309 = int_to_ptr.vmem [resolvable:$true] %s308
          %311 = dma.hbm_to_vmem [thread:$0]  %s4, 32, %s309, [#allocation11]
        $region20: #{tpu_custom_call.1} parent=11 // pred_fallthru
          _
        // Predicated region
        $region21: #{tpu_custom_call.1} parent=11 // pred_check
          %p312 = pneg %p184
        $region22: #{tpu_custom_call.1} parent=11 // pred_check_branch
          %314 = sbr.rel (%p312) target = $region24
        $region23: #{tpu_custom_call.1} parent=11 // pred_region
          %s316 = ssub.s32 32, 32
          %317 = vsyncadd [#allocation14], %s316
          %s319 = sshll.u32 [#allocation13], 4
          %s320 = int_to_ptr.vmem [resolvable:$true] %s319
          %322 = dma.hbm_to_vmem [thread:$0]  %s5, 32, %s320, [#allocation14]
        $region24: #{tpu_custom_call.1} parent=11 // pred_fallthru
          _
        // Predicated region
        $region25: #{tpu_custom_call.1} parent=11 // pred_check
          %p323 = pneg %p205
        $region26: #{tpu_custom_call.1} parent=11 // pred_check_branch
          %325 = sbr.rel (%p323) target = $region28
        $region27: #{tpu_custom_call.1} parent=11 // pred_region
          %s327 = ssub.s32 32, 32
          %328 = vsyncadd [#allocation14], %s327
          %s330 = sshll.u32 [#allocation15], 4
          %s331 = int_to_ptr.vmem [resolvable:$true] %s330
          %333 = dma.hbm_to_vmem [thread:$0]  %s6, 32, %s331, [#allocation14]
        $region28: #{tpu_custom_call.1} parent=11 // pred_fallthru
          _
        // Predicated region
        $region29: #{tpu_custom_call.1} parent=11 // pred_check
          %p334 = pneg %p226
        $region30: #{tpu_custom_call.1} parent=11 // pred_check_branch
          %336 = sbr.rel (%p334) target = $region32
        $region31: #{tpu_custom_call.1} parent=11 // pred_region
          %s338 = ssub.s32 4096, 4096
          %339 = vsyncadd [#allocation17], %s338
          %s340 = sshll.u32 [#allocation16], 4
          %s341 = int_to_ptr.vmem [resolvable:$true] %s340
          %346 = dma.hbm_to_vmem [thread:$0]  %s7, 4096, %s341, [#allocation17], 128, 128, 8
        $region32: #{tpu_custom_call.1} parent=11 // pred_fallthru
          _
        // Predicated region
        $region33: #{tpu_custom_call.1} parent=11 // pred_check
          %p347 = pneg %p247
        $region34: #{tpu_custom_call.1} parent=11 // pred_check_branch
          %349 = sbr.rel (%p347) target = $region36
        $region35: #{tpu_custom_call.1} parent=11 // pred_region
          %s351 = ssub.s32 16, 16
          %352 = vsyncadd [#allocation17], %s351
          %s354 = sshll.u32 [#allocation18], 4
          %s355 = int_to_ptr.vmem [resolvable:$true] %s354
          %357 = dma.hbm_to_vmem [thread:$0]  %s8, 16, %s355, [#allocation17]
        $region36: #{tpu_custom_call.1} parent=11 // pred_fallthru
          _
      $region12: #{tpu_custom_call.1} parent=5 // pred_fallthru
        _
      %p358 = scmp.lt.s32.totalorder %s27, 2
      // Predicated region
      $region37: #{tpu_custom_call.1} parent=5 // pred_check
        %p359 = pneg %p358
      $region38: #{tpu_custom_call.1} parent=5 // pred_check_branch
        %361 = sbr.rel (%p359) target = $region40
      $region39: #{tpu_custom_call.1} parent=5 // pred_region
        // Predicated region
        $region41: #{tpu_custom_call.1} parent=39 // pred_check
          %p362 = pneg %p61
        $region42: #{tpu_custom_call.1} parent=39 // pred_check_branch
          %364 = sbr.rel (%p362) target = $region44
        $region43: #{tpu_custom_call.1} parent=39 // pred_region
          %s365 = sand.u32 %s51, 1
          %s366 = scalar_lea.sflag [#allocation5], %s365
          %s367 = sand.u32 %s51, 1
          %s368 = smul.addr %s367, 3072
          %s369 = scalar_lea.vmem [#allocation4], %s368
          %s370 = smul.u32 8, %s34
          %s371 = smul.u32 16, %s35
          %s373 = ssub.s32 49152, 49152
          %374 = vsyncadd %s366, %s373
          %s375 = smul.addr %s371, 6
          %s376 = smul.addr %s370, 96
          %s377 = sadd.s32 %s375, %s376
          %s378 = smul.addr %s377, 64
          %s379 = scalar_lea.hbm %s0, %s378
          %s380 = sshll.u32 %s369, 4
          %s381 = int_to_ptr.vmem [resolvable:$true] %s380
          %386 = dma.hbm_to_vmem [thread:$0]  %s379, 49152, %s381, %s366, 384, 384, 24
        $region44: #{tpu_custom_call.1} parent=39 // pred_fallthru
          _
        // Predicated region
        $region45: #{tpu_custom_call.1} parent=39 // pred_check
          %p387 = pneg %p89
        $region46: #{tpu_custom_call.1} parent=39 // pred_check_branch
          %389 = sbr.rel (%p387) target = $region48
        $region47: #{tpu_custom_call.1} parent=39 // pred_region
          %s390 = sand.u32 %s27, 1
          %s391 = scalar_lea.sflag [#allocation8], %s390
          %s392 = sand.u32 %s79, 1
          %s393 = smul.addr %s392, 3072
          %s394 = scalar_lea.vmem [#allocation7], %s393
          %s395 = smul.u32 8, %s34
          %s396 = smul.u32 16, %s35
          %s398 = ssub.s32 49152, 49152
          %399 = vsyncadd %s391, %s398
          %s400 = smul.addr %s396, 6
          %s401 = smul.addr %s395, 96
          %s402 = sadd.s32 %s400, %s401
          %s403 = smul.addr %s402, 64
          %s404 = scalar_lea.hbm %s1, %s403
          %s405 = sshll.u32 %s394, 4
          %s406 = int_to_ptr.vmem [resolvable:$true] %s405
          %411 = dma.hbm_to_vmem [thread:$0]  %s404, 49152, %s406, %s391, 384, 384, 24
        $region48: #{tpu_custom_call.1} parent=39 // pred_fallthru
          _
        // Predicated region
        $region49: #{tpu_custom_call.1} parent=39 // pred_check
          %p412 = pneg %p115
        $region50: #{tpu_custom_call.1} parent=39 // pred_check_branch
          %414 = sbr.rel (%p412) target = $region52
        $region51: #{tpu_custom_call.1} parent=39 // pred_region
          %s415 = sand.u32 %s27, 1
          %s416 = scalar_lea.sflag [#allocation8], %s415
          %s417 = sand.u32 %s105, 1
          %s418 = smul.addr %s417, 48
          %s419 = scalar_lea.vmem [#allocation9], %s418
          %s421 = ssub.s32 768, 768
          %422 = vsyncadd %s416, %s421
          %s423 = smul.addr %s34, 6
          %s424 = smul.addr %s423, 128
          %s425 = scalar_lea.hbm %s2, %s424
          %s427 = sshll.u32 %s419, 4
          %s428 = int_to_ptr.vmem [resolvable:$true] %s427
          %430 = dma.hbm_to_vmem [thread:$0]  %s425, 768, %s428, %s416
        $region52: #{tpu_custom_call.1} parent=39 // pred_fallthru
          _
      $region40: #{tpu_custom_call.1} parent=5 // pred_fallthru
        _
      %p431 = scmp.le.s32.totalorder 1, %s27
      %p432 = scmp.lt.s32.totalorder %s27, 3
      %p433 = pnand %p431, %p432
      %p434 = pneg %p433
      // Predicated region
      $region53: #{tpu_custom_call.1} parent=5 // pred_check
        _
      $region54: #{tpu_custom_call.1} parent=5 // pred_check_branch
        %436 = sbr.rel (%p433) target = $region56
      $region55: #{tpu_custom_call.1} parent=5 // pred_region
        %s437 = ssub.s32 %s27, 1
        %s438 = sand.u32 %s54, 1
        %s439 = scalar_lea.sflag [#allocation5], %s438
        %s440 = sand.u32 %s54, 1
        %s441 = smul.addr %s440, 3072
        %s442 = scalar_lea.vmem [#allocation4], %s441
        // Predicated region
        $region57: #{tpu_custom_call.1} parent=55 // pred_check
          %p443 = pneg %p67
        $region58: #{tpu_custom_call.1} parent=55 // pred_check_branch
          %445 = sbr.rel (%p443) target = $region60
        $region59: #{tpu_custom_call.1} parent=55 // pred_region
          %446 = dma.done %s439, 49152
        $region60: #{tpu_custom_call.1} parent=55 // pred_fallthru
          _
        %s447 = sand.u32 %s32, 1
        %s448 = scalar_lea.sflag [#allocation8], %s447
        %s449 = sand.u32 %s82, 1
        %s450 = smul.addr %s449, 3072
        %s451 = scalar_lea.vmem [#allocation7], %s450
        // Predicated region
        $region61: #{tpu_custom_call.1} parent=55 // pred_check
          %p452 = pneg %p95
        $region62: #{tpu_custom_call.1} parent=55 // pred_check_branch
          %454 = sbr.rel (%p452) target = $region64
        $region63: #{tpu_custom_call.1} parent=55 // pred_region
          %455 = dma.done %s448, 49152
        $region64: #{tpu_custom_call.1} parent=55 // pred_fallthru
          _
        %s456 = sand.u32 %s32, 1
        %s457 = scalar_lea.sflag [#allocation8], %s456
        %s458 = sand.u32 %s108, 1
        %s459 = smul.addr %s458, 48
        %s460 = scalar_lea.vmem [#allocation9], %s459
        // Predicated region
        $region65: #{tpu_custom_call.1} parent=55 // pred_check
          %p461 = pneg %p121
        $region66: #{tpu_custom_call.1} parent=55 // pred_check_branch
          %463 = sbr.rel (%p461) target = $region68
        $region67: #{tpu_custom_call.1} parent=55 // pred_region
          %464 = dma.done %s457, 768
        $region68: #{tpu_custom_call.1} parent=55 // pred_fallthru
          _
        // Predicated region
        $region69: #{tpu_custom_call.1} parent=55 // pred_check
          %p465 = pneg %p142
        $region70: #{tpu_custom_call.1} parent=55 // pred_check_branch
          %467 = sbr.rel (%p465) target = $region72
        $region71: #{tpu_custom_call.1} parent=55 // pred_region
          %468 = dma.done [#allocation11], 24576
        $region72: #{tpu_custom_call.1} parent=55 // pred_fallthru
          _
        // Predicated region
        $region73: #{tpu_custom_call.1} parent=55 // pred_check
          %p469 = pneg %p163
        $region74: #{tpu_custom_call.1} parent=55 // pred_check_branch
          %471 = sbr.rel (%p469) target = $region76
        $region75: #{tpu_custom_call.1} parent=55 // pred_region
          %472 = dma.done [#allocation11], 32
        $region76: #{tpu_custom_call.1} parent=55 // pred_fallthru
          _
        // Predicated region
        $region77: #{tpu_custom_call.1} parent=55 // pred_check
          %p473 = pneg %p184
        $region78: #{tpu_custom_call.1} parent=55 // pred_check_branch
          %475 = sbr.rel (%p473) target = $region80
        $region79: #{tpu_custom_call.1} parent=55 // pred_region
          %476 = dma.done [#allocation14], 32
        $region80: #{tpu_custom_call.1} parent=55 // pred_fallthru
          _
        // Predicated region
        $region81: #{tpu_custom_call.1} parent=55 // pred_check
          %p477 = pneg %p205
        $region82: #{tpu_custom_call.1} parent=55 // pred_check_branch
          %479 = sbr.rel (%p477) target = $region84
        $region83: #{tpu_custom_call.1} parent=55 // pred_region
          %480 = dma.done [#allocation14], 32
        $region84: #{tpu_custom_call.1} parent=55 // pred_fallthru
          _
        // Predicated region
        $region85: #{tpu_custom_call.1} parent=55 // pred_check
          %p481 = pneg %p226
        $region86: #{tpu_custom_call.1} parent=55 // pred_check_branch
          %483 = sbr.rel (%p481) target = $region88
        $region87: #{tpu_custom_call.1} parent=55 // pred_region
          %484 = dma.done [#allocation17], 4096
        $region88: #{tpu_custom_call.1} parent=55 // pred_fallthru
          _
        // Predicated region
        $region89: #{tpu_custom_call.1} parent=55 // pred_check
          %p485 = pneg %p247
        $region90: #{tpu_custom_call.1} parent=55 // pred_check_branch
          %487 = sbr.rel (%p485) target = $region92
        $region91: #{tpu_custom_call.1} parent=55 // pred_region
          %488 = dma.done [#allocation17], 16
        $region92: #{tpu_custom_call.1} parent=55 // pred_fallthru
          _
        %s489 = sand.u32 %s54, 1
        %s490 = scalar_lea.sflag [#allocation5], %s489
        %s491 = sand.u32 %s54, 1
        %s492 = smul.addr %s491, 3072
        %s493 = scalar_lea.vmem [#allocation4], %s492
        %p494 = pneg %p67
        %p495 = pneg %p64
        %s496 = sand.u32 %s32, 1
        %s497 = scalar_lea.sflag [#allocation8], %s496
        %s498 = sand.u32 %s82, 1
        %s499 = smul.addr %s498, 3072
        %s500 = scalar_lea.vmem [#allocation7], %s499
        %p501 = pneg %p95
        %p502 = pneg %p92
        %s503 = sand.u32 %s32, 1
        %s504 = scalar_lea.sflag [#allocation8], %s503
        %s505 = sand.u32 %s108, 1
        %s506 = smul.addr %s505, 48
        %s507 = scalar_lea.vmem [#allocation9], %s506
        %p508 = pneg %p121
        %p509 = pneg %p118
        %p510 = pneg %p142
        %p511 = pneg %p139
        %p512 = pneg %p163
        %p513 = pneg %p160
        %p514 = pneg %p184
        %p515 = pneg %p181
        %p516 = pneg %p205
        %p517 = pneg %p202
        %p518 = pneg %p226
        %p519 = pneg %p223
        %p520 = pneg %p247
        %p521 = pneg %p244
        %p522 = pneg %p273
        %p523 = pneg %p270
        %s524 = sand.u32 %s260, 1
        %s525 = scalar_lea.sflag [#allocation6], %s524
        %s526 = sand.u32 %s260, 1
        %s527 = smul.addr %s526, 8
        %s528 = scalar_lea.vmem [#allocation19], %s527
        %s529 = smul.u32 8, %s36
        %s530 = smul.u32 16, %s37
        %s531 = smul.u32 8, %s36
        %s532 = smul.u32 16, %s37
        %p533 = scmp.eq.s32.totalorder %s37, 0
        // Predicated region
        $region93: #{tpu_custom_call.1} parent=55 // pred_check
          %p534 = pneg %p533
        $region94: #{tpu_custom_call.1} parent=55 // pred_check_branch
          %536 = sbr.rel (%p534) target = $region96
        $region95: #{tpu_custom_call.1} parent=55 // pred_region
          %537 = vst [vmem:[#allocation2] sm:$0xff] 0.0
          %538 = vst [vmem:[#allocation2 + $0x8] sm:$0xff] 0.0
          %539 = vst [vmem:[#allocation2 + $0x10] sm:$0xff] 0.0
          %540 = vst [vmem:[#allocation2 + $0x18] sm:$0xff] 0.0
          %541 = vst [vmem:[#allocation2 + $0x20] sm:$0xff] 0.0
          %542 = vst [vmem:[#allocation2 + $0x28] sm:$0xff] 0.0
          %543 = vst [vmem:[#allocation3] sm:$0xff] 0.0
          %544 = vst [vmem:[#allocation3 + $0x8] sm:$0xff] 0.0
          %545 = vst [vmem:[#allocation3 + $0x10] sm:$0xff] 0.0
          %546 = vst [vmem:[#allocation3 + $0x18] sm:$0xff] 0.0
          %547 = vst [vmem:[#allocation3 + $0x20] sm:$0xff] 0.0
          %548 = vst [vmem:[#allocation3 + $0x28] sm:$0xff] 0.0
        $region96: #{tpu_custom_call.1} parent=55 // pred_fallthru
          _
        loop: start=0, step=1, limit=8
        $region97: #{tpu_custom_call.1} parent=55 // loop_pre_header
          _
        $region98: #{tpu_custom_call.1} parent=55 // loop_header
          %s550 = sphi 0, %s554
          %p551 = scmp.ge.s32.totalorder %s550, 8
        $region99: #{tpu_custom_call.1} parent=55 // loop_header_branch
          %553 = sbr.rel (%p551) target = $region103
        $region100: #{tpu_custom_call.1} parent=55 // loop_body
          %s555 = smul.u32 %s550, 16
          %s556 = sshra.s32 %s555, 3
          %s557 = sand.u32 %s555, 7
          %s558 = smul.u32 %s556, 6
          %s559 = smul.addr %s558, 4
          %s560 = scalar_lea.vmem %s442, %s559 [#allocation4]
          %v561 = vld [vmem:[%s560] sm:$0xff]
          %v562 = vld [vmem:[%s560 + $0x8] sm:$0xff]
          %v563 = vld [vmem:[%s560 + $0x10] sm:$0xff]
          %v564 = vld [vmem:[%s560 + $0x18] sm:$0xff]
          %v565 = vld [vmem:[%s560 + $0x20] sm:$0xff]
          %v566 = vld [vmem:[%s560 + $0x28] sm:$0xff]
          %v567 = vld [vmem:[%s560 + $0x180] sm:$0xff]
          %v568 = vld [vmem:[%s560 + $0x188] sm:$0xff]
          %v569 = vld [vmem:[%s560 + $0x190] sm:$0xff]
          %v570 = vld [vmem:[%s560 + $0x198] sm:$0xff]
          %v571 = vld [vmem:[%s560 + $0x1a0] sm:$0xff]
          %v572 = vld [vmem:[%s560 + $0x1a8] sm:$0xff]
          %v573 = vld [vmem:[%s560 + $0x300] sm:$0xff]
          %v574 = vld [vmem:[%s560 + $0x308] sm:$0xff]
          %v575 = vld [vmem:[%s560 + $0x310] sm:$0xff]
          %v576 = vld [vmem:[%s560 + $0x318] sm:$0xff]
          %v577 = vld [vmem:[%s560 + $0x320] sm:$0xff]
          %v578 = vld [vmem:[%s560 + $0x328] sm:$0xff]
          %v579 = vld [vmem:[%s560 + $0x480] sm:$0xff]
          %v580 = vld [vmem:[%s560 + $0x488] sm:$0xff]
          %v581 = vld [vmem:[%s560 + $0x490] sm:$0xff]
          %v582 = vld [vmem:[%s560 + $0x498] sm:$0xff]
          %v583 = vld [vmem:[%s560 + $0x4a0] sm:$0xff]
          %v584 = vld [vmem:[%s560 + $0x4a8] sm:$0xff]
          %v585 = vld [vmem:[%s560 + $0x600] sm:$0xff]
          %v586 = vld [vmem:[%s560 + $0x608] sm:$0xff]
          %v587 = vld [vmem:[%s560 + $0x610] sm:$0xff]
          %v588 = vld [vmem:[%s560 + $0x618] sm:$0xff]
          %v589 = vld [vmem:[%s560 + $0x620] sm:$0xff]
          %v590 = vld [vmem:[%s560 + $0x628] sm:$0xff]
          %v591 = vld [vmem:[%s560 + $0x780] sm:$0xff]
          %v592 = vld [vmem:[%s560 + $0x788] sm:$0xff]
          %v593 = vld [vmem:[%s560 + $0x790] sm:$0xff]
          %v594 = vld [vmem:[%s560 + $0x798] sm:$0xff]
          %v595 = vld [vmem:[%s560 + $0x7a0] sm:$0xff]
          %v596 = vld [vmem:[%s560 + $0x7a8] sm:$0xff]
          %v597 = vld [vmem:[%s560 + $0x900] sm:$0xff]
          %v598 = vld [vmem:[%s560 + $0x908] sm:$0xff]
          %v599 = vld [vmem:[%s560 + $0x910] sm:$0xff]
          %v600 = vld [vmem:[%s560 + $0x918] sm:$0xff]
          %v601 = vld [vmem:[%s560 + $0x920] sm:$0xff]
          %v602 = vld [vmem:[%s560 + $0x928] sm:$0xff]
          %v603 = vld [vmem:[%s560 + $0xa80] sm:$0xff]
          %v604 = vld [vmem:[%s560 + $0xa88] sm:$0xff]
          %v605 = vld [vmem:[%s560 + $0xa90] sm:$0xff]
          %v606 = vld [vmem:[%s560 + $0xa98] sm:$0xff]
          %v607 = vld [vmem:[%s560 + $0xaa0] sm:$0xff]
          %v608 = vld [vmem:[%s560 + $0xaa8] sm:$0xff]
          %v609 = vunpack.c.l.bf16 %v561
          %v610 = vunpack.c.h.bf16 %v561
          %v611 = vunpack.c.l.bf16 %v562
          %v612 = vunpack.c.h.bf16 %v562
          %v613 = vunpack.c.l.bf16 %v563
          %v614 = vunpack.c.h.bf16 %v563
          %v615 = vunpack.c.l.bf16 %v564
          %v616 = vunpack.c.h.bf16 %v564
          %v617 = vunpack.c.l.bf16 %v565
          %v618 = vunpack.c.h.bf16 %v565
          %v619 = vunpack.c.l.bf16 %v566
          %v620 = vunpack.c.h.bf16 %v566
          %v621 = vunpack.c.l.bf16 %v567
          %v622 = vunpack.c.h.bf16 %v567
          %v623 = vunpack.c.l.bf16 %v568
          %v624 = vunpack.c.h.bf16 %v568
          %v625 = vunpack.c.l.bf16 %v569
          %v626 = vunpack.c.h.bf16 %v569
          %v627 = vunpack.c.l.bf16 %v570
          %v628 = vunpack.c.h.bf16 %v570
          %v629 = vunpack.c.l.bf16 %v571
          %v630 = vunpack.c.h.bf16 %v571
          %v631 = vunpack.c.l.bf16 %v572
          %v632 = vunpack.c.h.bf16 %v572
          %v633 = vunpack.c.l.bf16 %v573
          %v634 = vunpack.c.h.bf16 %v573
          %v635 = vunpack.c.l.bf16 %v574
          %v636 = vunpack.c.h.bf16 %v574
          %v637 = vunpack.c.l.bf16 %v575
          %v638 = vunpack.c.h.bf16 %v575
          %v639 = vunpack.c.l.bf16 %v576
          %v640 = vunpack.c.h.bf16 %v576
          %v641 = vunpack.c.l.bf16 %v577
          %v642 = vunpack.c.h.bf16 %v577
          %v643 = vunpack.c.l.bf16 %v578
          %v644 = vunpack.c.h.bf16 %v578
          %v645 = vunpack.c.l.bf16 %v579
          %v646 = vunpack.c.h.bf16 %v579
          %v647 = vunpack.c.l.bf16 %v580
          %v648 = vunpack.c.h.bf16 %v580
          %v649 = vunpack.c.l.bf16 %v581
          %v650 = vunpack.c.h.bf16 %v581
          %v651 = vunpack.c.l.bf16 %v582
          %v652 = vunpack.c.h.bf16 %v582
          %v653 = vunpack.c.l.bf16 %v583
          %v654 = vunpack.c.h.bf16 %v583
          %v655 = vunpack.c.l.bf16 %v584
          %v656 = vunpack.c.h.bf16 %v584
          %v657 = vunpack.c.l.bf16 %v585
          %v658 = vunpack.c.h.bf16 %v585
          %v659 = vunpack.c.l.bf16 %v586
          %v660 = vunpack.c.h.bf16 %v586
          %v661 = vunpack.c.l.bf16 %v587
          %v662 = vunpack.c.h.bf16 %v587
          %v663 = vunpack.c.l.bf16 %v588
          %v664 = vunpack.c.h.bf16 %v588
          %v665 = vunpack.c.l.bf16 %v589
          %v666 = vunpack.c.h.bf16 %v589
          %v667 = vunpack.c.l.bf16 %v590
          %v668 = vunpack.c.h.bf16 %v590
          %v669 = vunpack.c.l.bf16 %v591
          %v670 = vunpack.c.h.bf16 %v591
          %v671 = vunpack.c.l.bf16 %v592
          %v672 = vunpack.c.h.bf16 %v592
          %v673 = vunpack.c.l.bf16 %v593
          %v674 = vunpack.c.h.bf16 %v593
          %v675 = vunpack.c.l.bf16 %v594
          %v676 = vunpack.c.h.bf16 %v594
          %v677 = vunpack.c.l.bf16 %v595
          %v678 = vunpack.c.h.bf16 %v595
          %v679 = vunpack.c.l.bf16 %v596
          %v680 = vunpack.c.h.bf16 %v596
          %v681 = vunpack.c.l.bf16 %v597
          %v682 = vunpack.c.h.bf16 %v597
          %v683 = vunpack.c.l.bf16 %v598
          %v684 = vunpack.c.h.bf16 %v598
          %v685 = vunpack.c.l.bf16 %v599
          %v686 = vunpack.c.h.bf16 %v599
          %v687 = vunpack.c.l.bf16 %v600
          %v688 = vunpack.c.h.bf16 %v600
          %v689 = vunpack.c.l.bf16 %v601
          %v690 = vunpack.c.h.bf16 %v601
          %v691 = vunpack.c.l.bf16 %v602
          %v692 = vunpack.c.h.bf16 %v602
          %v693 = vunpack.c.l.bf16 %v603
          %v694 = vunpack.c.h.bf16 %v603
          %v695 = vunpack.c.l.bf16 %v604
          %v696 = vunpack.c.h.bf16 %v604
          %v697 = vunpack.c.l.bf16 %v605
          %v698 = vunpack.c.h.bf16 %v605
          %v699 = vunpack.c.l.bf16 %v606
          %v700 = vunpack.c.h.bf16 %v606
          %v701 = vunpack.c.l.bf16 %v607
          %v702 = vunpack.c.h.bf16 %v607
          %v703 = vunpack.c.l.bf16 %v608
          %v704 = vunpack.c.h.bf16 %v608
          %s705 = smul.addr %s558, 4
          %s706 = scalar_lea.vmem %s451, %s705 [#allocation7]
          %v707 = vld [vmem:[%s706] sm:$0xff]
          %v708 = vld [vmem:[%s706 + $0x8] sm:$0xff]
          %v709 = vld [vmem:[%s706 + $0x10] sm:$0xff]
          %v710 = vld [vmem:[%s706 + $0x18] sm:$0xff]
          %v711 = vld [vmem:[%s706 + $0x20] sm:$0xff]
          %v712 = vld [vmem:[%s706 + $0x28] sm:$0xff]
          %v713 = vld [vmem:[%s706 + $0x180] sm:$0xff]
          %v714 = vld [vmem:[%s706 + $0x188] sm:$0xff]
          %v715 = vld [vmem:[%s706 + $0x190] sm:$0xff]
          %v716 = vld [vmem:[%s706 + $0x198] sm:$0xff]
          %v717 = vld [vmem:[%s706 + $0x1a0] sm:$0xff]
          %v718 = vld [vmem:[%s706 + $0x1a8] sm:$0xff]
          %v719 = vld [vmem:[%s706 + $0x300] sm:$0xff]
          %v720 = vld [vmem:[%s706 + $0x308] sm:$0xff]
          %v721 = vld [vmem:[%s706 + $0x310] sm:$0xff]
          %v722 = vld [vmem:[%s706 + $0x318] sm:$0xff]
          %v723 = vld [vmem:[%s706 + $0x320] sm:$0xff]
          %v724 = vld [vmem:[%s706 + $0x328] sm:$0xff]
          %v725 = vld [vmem:[%s706 + $0x480] sm:$0xff]
          %v726 = vld [vmem:[%s706 + $0x488] sm:$0xff]
          %v727 = vld [vmem:[%s706 + $0x490] sm:$0xff]
          %v728 = vld [vmem:[%s706 + $0x498] sm:$0xff]
          %v729 = vld [vmem:[%s706 + $0x4a0] sm:$0xff]
          %v730 = vld [vmem:[%s706 + $0x4a8] sm:$0xff]
          %v731 = vld [vmem:[%s706 + $0x600] sm:$0xff]
          %v732 = vld [vmem:[%s706 + $0x608] sm:$0xff]
          %v733 = vld [vmem:[%s706 + $0x610] sm:$0xff]
          %v734 = vld [vmem:[%s706 + $0x618] sm:$0xff]
          %v735 = vld [vmem:[%s706 + $0x620] sm:$0xff]
          %v736 = vld [vmem:[%s706 + $0x628] sm:$0xff]
          %v737 = vld [vmem:[%s706 + $0x780] sm:$0xff]
          %v738 = vld [vmem:[%s706 + $0x788] sm:$0xff]
          %v739 = vld [vmem:[%s706 + $0x790] sm:$0xff]
          %v740 = vld [vmem:[%s706 + $0x798] sm:$0xff]
          %v741 = vld [vmem:[%s706 + $0x7a0] sm:$0xff]
          %v742 = vld [vmem:[%s706 + $0x7a8] sm:$0xff]
          %v743 = vld [vmem:[%s706 + $0x900] sm:$0xff]
          %v744 = vld [vmem:[%s706 + $0x908] sm:$0xff]
          %v745 = vld [vmem:[%s706 + $0x910] sm:$0xff]
          %v746 = vld [vmem:[%s706 + $0x918] sm:$0xff]
          %v747 = vld [vmem:[%s706 + $0x920] sm:$0xff]
          %v748 = vld [vmem:[%s706 + $0x928] sm:$0xff]
          %v749 = vld [vmem:[%s706 + $0xa80] sm:$0xff]
          %v750 = vld [vmem:[%s706 + $0xa88] sm:$0xff]
          %v751 = vld [vmem:[%s706 + $0xa90] sm:$0xff]
          %v752 = vld [vmem:[%s706 + $0xa98] sm:$0xff]
          %v753 = vld [vmem:[%s706 + $0xaa0] sm:$0xff]
          %v754 = vld [vmem:[%s706 + $0xaa8] sm:$0xff]
          %v755 = vunpack.c.l.bf16 %v707
          %v756 = vunpack.c.h.bf16 %v707
          %v757 = vunpack.c.l.bf16 %v708
          %v758 = vunpack.c.h.bf16 %v708
          %v759 = vunpack.c.l.bf16 %v709
          %v760 = vunpack.c.h.bf16 %v709
          %v761 = vunpack.c.l.bf16 %v710
          %v762 = vunpack.c.h.bf16 %v710
          %v763 = vunpack.c.l.bf16 %v711
          %v764 = vunpack.c.h.bf16 %v711
          %v765 = vunpack.c.l.bf16 %v712
          %v766 = vunpack.c.h.bf16 %v712
          %v767 = vunpack.c.l.bf16 %v713
          %v768 = vunpack.c.h.bf16 %v713
          %v769 = vunpack.c.l.bf16 %v714
          %v770 = vunpack.c.h.bf16 %v714
          %v771 = vunpack.c.l.bf16 %v715
          %v772 = vunpack.c.h.bf16 %v715
          %v773 = vunpack.c.l.bf16 %v716
          %v774 = vunpack.c.h.bf16 %v716
          %v775 = vunpack.c.l.bf16 %v717
          %v776 = vunpack.c.h.bf16 %v717
          %v777 = vunpack.c.l.bf16 %v718
          %v778 = vunpack.c.h.bf16 %v718
          %v779 = vunpack.c.l.bf16 %v719
          %v780 = vunpack.c.h.bf16 %v719
          %v781 = vunpack.c.l.bf16 %v720
          %v782 = vunpack.c.h.bf16 %v720
          %v783 = vunpack.c.l.bf16 %v721
          %v784 = vunpack.c.h.bf16 %v721
          %v785 = vunpack.c.l.bf16 %v722
          %v786 = vunpack.c.h.bf16 %v722
          %v787 = vunpack.c.l.bf16 %v723
          %v788 = vunpack.c.h.bf16 %v723
          %v789 = vunpack.c.l.bf16 %v724
          %v790 = vunpack.c.h.bf16 %v724
          %v791 = vunpack.c.l.bf16 %v725
          %v792 = vunpack.c.h.bf16 %v725
          %v793 = vunpack.c.l.bf16 %v726
          %v794 = vunpack.c.h.bf16 %v726
          %v795 = vunpack.c.l.bf16 %v727
          %v796 = vunpack.c.h.bf16 %v727
          %v797 = vunpack.c.l.bf16 %v728
          %v798 = vunpack.c.h.bf16 %v728
          %v799 = vunpack.c.l.bf16 %v729
          %v800 = vunpack.c.h.bf16 %v729
          %v801 = vunpack.c.l.bf16 %v730
          %v802 = vunpack.c.h.bf16 %v730
          %v803 = vunpack.c.l.bf16 %v731
          %v804 = vunpack.c.h.bf16 %v731
          %v805 = vunpack.c.l.bf16 %v732
          %v806 = vunpack.c.h.bf16 %v732
          %v807 = vunpack.c.l.bf16 %v733
          %v808 = vunpack.c.h.bf16 %v733
          %v809 = vunpack.c.l.bf16 %v734
          %v810 = vunpack.c.h.bf16 %v734
          %v811 = vunpack.c.l.bf16 %v735
          %v812 = vunpack.c.h.bf16 %v735
          %v813 = vunpack.c.l.bf16 %v736
          %v814 = vunpack.c.h.bf16 %v736
          %v815 = vunpack.c.l.bf16 %v737
          %v816 = vunpack.c.h.bf16 %v737
          %v817 = vunpack.c.l.bf16 %v738
          %v818 = vunpack.c.h.bf16 %v738
          %v819 = vunpack.c.l.bf16 %v739
          %v820 = vunpack.c.h.bf16 %v739
          %v821 = vunpack.c.l.bf16 %v740
          %v822 = vunpack.c.h.bf16 %v740
          %v823 = vunpack.c.l.bf16 %v741
          %v824 = vunpack.c.h.bf16 %v741
          %v825 = vunpack.c.l.bf16 %v742
          %v826 = vunpack.c.h.bf16 %v742
          %v827 = vunpack.c.l.bf16 %v743
          %v828 = vunpack.c.h.bf16 %v743
          %v829 = vunpack.c.l.bf16 %v744
          %v830 = vunpack.c.h.bf16 %v744
          %v831 = vunpack.c.l.bf16 %v745
          %v832 = vunpack.c.h.bf16 %v745
          %v833 = vunpack.c.l.bf16 %v746
          %v834 = vunpack.c.h.bf16 %v746
          %v835 = vunpack.c.l.bf16 %v747
          %v836 = vunpack.c.h.bf16 %v747
          %v837 = vunpack.c.l.bf16 %v748
          %v838 = vunpack.c.h.bf16 %v748
          %v839 = vunpack.c.l.bf16 %v749
          %v840 = vunpack.c.h.bf16 %v749
          %v841 = vunpack.c.l.bf16 %v750
          %v842 = vunpack.c.h.bf16 %v750
          %v843 = vunpack.c.l.bf16 %v751
          %v844 = vunpack.c.h.bf16 %v751
          %v845 = vunpack.c.l.bf16 %v752
          %v846 = vunpack.c.h.bf16 %v752
          %v847 = vunpack.c.l.bf16 %v753
          %v848 = vunpack.c.h.bf16 %v753
          %v849 = vunpack.c.l.bf16 %v754
          %v850 = vunpack.c.h.bf16 %v754
          %v851 = vld [vmem:[#allocation2] sm:$0xff]
          %v852 = vld [vmem:[#allocation2 + $0x8] sm:$0xff]
          %v853 = vld [vmem:[#allocation2 + $0x10] sm:$0xff]
          %v854 = vld [vmem:[#allocation2 + $0x18] sm:$0xff]
          %v855 = vld [vmem:[#allocation2 + $0x20] sm:$0xff]
          %v856 = vld [vmem:[#allocation2 + $0x28] sm:$0xff]
          %v857 = vmul.f32 %v609, %v755
          %v858 = vmul.f32 %v610, %v756
          %v859 = vmul.f32 %v611, %v757
          %v860 = vmul.f32 %v612, %v758
          %v861 = vmul.f32 %v613, %v759
          %v862 = vmul.f32 %v614, %v760
          %v863 = vmul.f32 %v615, %v761
          %v864 = vmul.f32 %v616, %v762
          %v865 = vmul.f32 %v617, %v763
          %v866 = vmul.f32 %v618, %v764
          %v867 = vmul.f32 %v619, %v765
          %v868 = vmul.f32 %v620, %v766
          %v869 = vmul.f32 %v621, %v767
          %v870 = vmul.f32 %v622, %v768
          %v871 = vmul.f32 %v623, %v769
          %v872 = vmul.f32 %v624, %v770
          %v873 = vmul.f32 %v625, %v771
          %v874 = vmul.f32 %v626, %v772
          %v875 = vmul.f32 %v627, %v773
          %v876 = vmul.f32 %v628, %v774
          %v877 = vmul.f32 %v629, %v775
          %v878 = vmul.f32 %v630, %v776
          %v879 = vmul.f32 %v631, %v777
          %v880 = vmul.f32 %v632, %v778
          %v881 = vmul.f32 %v633, %v779
          %v882 = vmul.f32 %v634, %v780
          %v883 = vmul.f32 %v635, %v781
          %v884 = vmul.f32 %v636, %v782
          %v885 = vmul.f32 %v637, %v783
          %v886 = vmul.f32 %v638, %v784
          %v887 = vmul.f32 %v639, %v785
          %v888 = vmul.f32 %v640, %v786
          %v889 = vmul.f32 %v641, %v787
          %v890 = vmul.f32 %v642, %v788
          %v891 = vmul.f32 %v643, %v789
          %v892 = vmul.f32 %v644, %v790
          %v893 = vmul.f32 %v645, %v791
          %v894 = vmul.f32 %v646, %v792
          %v895 = vmul.f32 %v647, %v793
          %v896 = vmul.f32 %v648, %v794
          %v897 = vmul.f32 %v649, %v795
          %v898 = vmul.f32 %v650, %v796
          %v899 = vmul.f32 %v651, %v797
          %v900 = vmul.f32 %v652, %v798
          %v901 = vmul.f32 %v653, %v799
          %v902 = vmul.f32 %v654, %v800
          %v903 = vmul.f32 %v655, %v801
          %v904 = vmul.f32 %v656, %v802
          %v905 = vmul.f32 %v657, %v803
          %v906 = vmul.f32 %v658, %v804
          %v907 = vmul.f32 %v659, %v805
          %v908 = vmul.f32 %v660, %v806
          %v909 = vmul.f32 %v661, %v807
          %v910 = vmul.f32 %v662, %v808
          %v911 = vmul.f32 %v663, %v809
          %v912 = vmul.f32 %v664, %v810
          %v913 = vmul.f32 %v665, %v811
          %v914 = vmul.f32 %v666, %v812
          %v915 = vmul.f32 %v667, %v813
          %v916 = vmul.f32 %v668, %v814
          %v917 = vmul.f32 %v669, %v815
          %v918 = vmul.f32 %v670, %v816
          %v919 = vmul.f32 %v671, %v817
          %v920 = vmul.f32 %v672, %v818
          %v921 = vmul.f32 %v673, %v819
          %v922 = vmul.f32 %v674, %v820
          %v923 = vmul.f32 %v675, %v821
          %v924 = vmul.f32 %v676, %v822
          %v925 = vmul.f32 %v677, %v823
          %v926 = vmul.f32 %v678, %v824
          %v927 = vmul.f32 %v679, %v825
          %v928 = vmul.f32 %v680, %v826
          %v929 = vmul.f32 %v681, %v827
          %v930 = vmul.f32 %v682, %v828
          %v931 = vmul.f32 %v683, %v829
          %v932 = vmul.f32 %v684, %v830
          %v933 = vmul.f32 %v685, %v831
          %v934 = vmul.f32 %v686, %v832
          %v935 = vmul.f32 %v687, %v833
          %v936 = vmul.f32 %v688, %v834
          %v937 = vmul.f32 %v689, %v835
          %v938 = vmul.f32 %v690, %v836
          %v939 = vmul.f32 %v691, %v837
          %v940 = vmul.f32 %v692, %v838
          %v941 = vmul.f32 %v693, %v839
          %v942 = vmul.f32 %v694, %v840
          %v943 = vmul.f32 %v695, %v841
          %v944 = vmul.f32 %v696, %v842
          %v945 = vmul.f32 %v697, %v843
          %v946 = vmul.f32 %v698, %v844
          %v947 = vmul.f32 %v699, %v845
          %v948 = vmul.f32 %v700, %v846
          %v949 = vmul.f32 %v701, %v847
          %v950 = vmul.f32 %v702, %v848
          %v951 = vmul.f32 %v703, %v849
          %v952 = vmul.f32 %v704, %v850
          %v953 = vadd.f32 %v857, %v863
          %v954 = vrot.slane %v953, 4
          %v955 = vadd.f32 %v953, %v954
          %v956 = vrot.slane %v955, 2
          %v957 = vadd.f32 %v955, %v956
          %v958 = vrot.slane %v957, 1
          %v959 = vadd.f32 %v957, %v958
          %v960 = vadd.f32 %v858, %v864
          %v961 = vrot.slane %v960, 4
          %v962 = vadd.f32 %v960, %v961
          %v963 = vrot.slane %v962, 2
          %v964 = vadd.f32 %v962, %v963
          %v965 = vrot.slane %v964, 1
          %v966 = vadd.f32 %v964, %v965
          %v967 = vadd.f32 %v859, %v865
          %v968 = vrot.slane %v967, 4
          %v969 = vadd.f32 %v967, %v968
          %v970 = vrot.slane %v969, 2
          %v971 = vadd.f32 %v969, %v970
          %v972 = vrot.slane %v971, 1
          %v973 = vadd.f32 %v971, %v972
          %v974 = vadd.f32 %v860, %v866
          %v975 = vrot.slane %v974, 4
          %v976 = vadd.f32 %v974, %v975
          %v977 = vrot.slane %v976, 2
          %v978 = vadd.f32 %v976, %v977
          %v979 = vrot.slane %v978, 1
          %v980 = vadd.f32 %v978, %v979
          %v981 = vadd.f32 %v861, %v867
          %v982 = vrot.slane %v981, 4
          %v983 = vadd.f32 %v981, %v982
          %v984 = vrot.slane %v983, 2
          %v985 = vadd.f32 %v983, %v984
          %v986 = vrot.slane %v985, 1
          %v987 = vadd.f32 %v985, %v986
          %v988 = vadd.f32 %v862, %v868
          %v989 = vrot.slane %v988, 4
          %v990 = vadd.f32 %v988, %v989
          %v991 = vrot.slane %v990, 2
          %v992 = vadd.f32 %v990, %v991
          %v993 = vrot.slane %v992, 1
          %v994 = vadd.f32 %v992, %v993
          %v995 = vadd.f32 %v869, %v875
          %v996 = vrot.slane %v995, 4
          %v997 = vadd.f32 %v995, %v996
          %v998 = vrot.slane %v997, 2
          %v999 = vadd.f32 %v997, %v998
          %v1000 = vrot.slane %v999, 1
          %v1001 = vadd.f32 %v999, %v1000
          %v1002 = vadd.f32 %v870, %v876
          %v1003 = vrot.slane %v1002, 4
          %v1004 = vadd.f32 %v1002, %v1003
          %v1005 = vrot.slane %v1004, 2
          %v1006 = vadd.f32 %v1004, %v1005
          %v1007 = vrot.slane %v1006, 1
          %v1008 = vadd.f32 %v1006, %v1007
          %v1009 = vadd.f32 %v871, %v877
          %v1010 = vrot.slane %v1009, 4
          %v1011 = vadd.f32 %v1009, %v1010
          %v1012 = vrot.slane %v1011, 2
          %v1013 = vadd.f32 %v1011, %v1012
          %v1014 = vrot.slane %v1013, 1
          %v1015 = vadd.f32 %v1013, %v1014
          %v1016 = vadd.f32 %v872, %v878
          %v1017 = vrot.slane %v1016, 4
          %v1018 = vadd.f32 %v1016, %v1017
          %v1019 = vrot.slane %v1018, 2
          %v1020 = vadd.f32 %v1018, %v1019
          %v1021 = vrot.slane %v1020, 1
          %v1022 = vadd.f32 %v1020, %v1021
          %v1023 = vadd.f32 %v873, %v879
          %v1024 = vrot.slane %v1023, 4
          %v1025 = vadd.f32 %v1023, %v1024
          %v1026 = vrot.slane %v1025, 2
          %v1027 = vadd.f32 %v1025, %v1026
          %v1028 = vrot.slane %v1027, 1
          %v1029 = vadd.f32 %v1027, %v1028
          %v1030 = vadd.f32 %v874, %v880
          %v1031 = vrot.slane %v1030, 4
          %v1032 = vadd.f32 %v1030, %v1031
          %v1033 = vrot.slane %v1032, 2
          %v1034 = vadd.f32 %v1032, %v1033
          %v1035 = vrot.slane %v1034, 1
          %v1036 = vadd.f32 %v1034, %v1035
          %v1037 = vadd.f32 %v881, %v887
          %v1038 = vrot.slane %v1037, 4
          %v1039 = vadd.f32 %v1037, %v1038
          %v1040 = vrot.slane %v1039, 2
          %v1041 = vadd.f32 %v1039, %v1040
          %v1042 = vrot.slane %v1041, 1
          %v1043 = vadd.f32 %v1041, %v1042
          %v1044 = vadd.f32 %v882, %v888
          %v1045 = vrot.slane %v1044, 4
          %v1046 = vadd.f32 %v1044, %v1045
          %v1047 = vrot.slane %v1046, 2
          %v1048 = vadd.f32 %v1046, %v1047
          %v1049 = vrot.slane %v1048, 1
          %v1050 = vadd.f32 %v1048, %v1049
          %v1051 = vadd.f32 %v883, %v889
          %v1052 = vrot.slane %v1051, 4
          %v1053 = vadd.f32 %v1051, %v1052
          %v1054 = vrot.slane %v1053, 2
          %v1055 = vadd.f32 %v1053, %v1054
          %v1056 = vrot.slane %v1055, 1
          %v1057 = vadd.f32 %v1055, %v1056
          %v1058 = vadd.f32 %v884, %v890
          %v1059 = vrot.slane %v1058, 4
          %v1060 = vadd.f32 %v1058, %v1059
          %v1061 = vrot.slane %v1060, 2
          %v1062 = vadd.f32 %v1060, %v1061
          %v1063 = vrot.slane %v1062, 1
          %v1064 = vadd.f32 %v1062, %v1063
          %v1065 = vadd.f32 %v885, %v891
          %v1066 = vrot.slane %v1065, 4
          %v1067 = vadd.f32 %v1065, %v1066
          %v1068 = vrot.slane %v1067, 2
          %v1069 = vadd.f32 %v1067, %v1068
          %v1070 = vrot.slane %v1069, 1
          %v1071 = vadd.f32 %v1069, %v1070
          %v1072 = vadd.f32 %v886, %v892
          %v1073 = vrot.slane %v1072, 4
          %v1074 = vadd.f32 %v1072, %v1073
          %v1075 = vrot.slane %v1074, 2
          %v1076 = vadd.f32 %v1074, %v1075
          %v1077 = vrot.slane %v1076, 1
          %v1078 = vadd.f32 %v1076, %v1077
          %v1079 = vadd.f32 %v893, %v899
          %v1080 = vrot.slane %v1079, 4
          %v1081 = vadd.f32 %v1079, %v1080
          %v1082 = vrot.slane %v1081, 2
          %v1083 = vadd.f32 %v1081, %v1082
          %v1084 = vrot.slane %v1083, 1
          %v1085 = vadd.f32 %v1083, %v1084
          %v1086 = vadd.f32 %v894, %v900
          %v1087 = vrot.slane %v1086, 4
          %v1088 = vadd.f32 %v1086, %v1087
          %v1089 = vrot.slane %v1088, 2
          %v1090 = vadd.f32 %v1088, %v1089
          %v1091 = vrot.slane %v1090, 1
          %v1092 = vadd.f32 %v1090, %v1091
          %v1093 = vadd.f32 %v895, %v901
          %v1094 = vrot.slane %v1093, 4
          %v1095 = vadd.f32 %v1093, %v1094
          %v1096 = vrot.slane %v1095, 2
          %v1097 = vadd.f32 %v1095, %v1096
          %v1098 = vrot.slane %v1097, 1
          %v1099 = vadd.f32 %v1097, %v1098
          %v1100 = vadd.f32 %v896, %v902
          %v1101 = vrot.slane %v1100, 4
          %v1102 = vadd.f32 %v1100, %v1101
          %v1103 = vrot.slane %v1102, 2
          %v1104 = vadd.f32 %v1102, %v1103
          %v1105 = vrot.slane %v1104, 1
          %v1106 = vadd.f32 %v1104, %v1105
          %v1107 = vadd.f32 %v897, %v903
          %v1108 = vrot.slane %v1107, 4
          %v1109 = vadd.f32 %v1107, %v1108
          %v1110 = vrot.slane %v1109, 2
          %v1111 = vadd.f32 %v1109, %v1110
          %v1112 = vrot.slane %v1111, 1
          %v1113 = vadd.f32 %v1111, %v1112
          %v1114 = vadd.f32 %v898, %v904
          %v1115 = vrot.slane %v1114, 4
          %v1116 = vadd.f32 %v1114, %v1115
          %v1117 = vrot.slane %v1116, 2
          %v1118 = vadd.f32 %v1116, %v1117
          %v1119 = vrot.slane %v1118, 1
          %v1120 = vadd.f32 %v1118, %v1119
          %v1121 = vadd.f32 %v905, %v911
          %v1122 = vrot.slane %v1121, 4
          %v1123 = vadd.f32 %v1121, %v1122
          %v1124 = vrot.slane %v1123, 2
          %v1125 = vadd.f32 %v1123, %v1124
          %v1126 = vrot.slane %v1125, 1
          %v1127 = vadd.f32 %v1125, %v1126
          %v1128 = vadd.f32 %v906, %v912
          %v1129 = vrot.slane %v1128, 4
          %v1130 = vadd.f32 %v1128, %v1129
          %v1131 = vrot.slane %v1130, 2
          %v1132 = vadd.f32 %v1130, %v1131
          %v1133 = vrot.slane %v1132, 1
          %v1134 = vadd.f32 %v1132, %v1133
          %v1135 = vadd.f32 %v907, %v913
          %v1136 = vrot.slane %v1135, 4
          %v1137 = vadd.f32 %v1135, %v1136
          %v1138 = vrot.slane %v1137, 2
          %v1139 = vadd.f32 %v1137, %v1138
          %v1140 = vrot.slane %v1139, 1
          %v1141 = vadd.f32 %v1139, %v1140
          %v1142 = vadd.f32 %v908, %v914
          %v1143 = vrot.slane %v1142, 4
          %v1144 = vadd.f32 %v1142, %v1143
          %v1145 = vrot.slane %v1144, 2
          %v1146 = vadd.f32 %v1144, %v1145
          %v1147 = vrot.slane %v1146, 1
          %v1148 = vadd.f32 %v1146, %v1147
          %v1149 = vadd.f32 %v909, %v915
          %v1150 = vrot.slane %v1149, 4
          %v1151 = vadd.f32 %v1149, %v1150
          %v1152 = vrot.slane %v1151, 2
          %v1153 = vadd.f32 %v1151, %v1152
          %v1154 = vrot.slane %v1153, 1
          %v1155 = vadd.f32 %v1153, %v1154
          %v1156 = vadd.f32 %v910, %v916
          %v1157 = vrot.slane %v1156, 4
          %v1158 = vadd.f32 %v1156, %v1157
          %v1159 = vrot.slane %v1158, 2
          %v1160 = vadd.f32 %v1158, %v1159
          %v1161 = vrot.slane %v1160, 1
          %v1162 = vadd.f32 %v1160, %v1161
          %v1163 = vadd.f32 %v917, %v923
          %v1164 = vrot.slane %v1163, 4
          %v1165 = vadd.f32 %v1163, %v1164
          %v1166 = vrot.slane %v1165, 2
          %v1167 = vadd.f32 %v1165, %v1166
          %v1168 = vrot.slane %v1167, 1
          %v1169 = vadd.f32 %v1167, %v1168
          %v1170 = vadd.f32 %v918, %v924
          %v1171 = vrot.slane %v1170, 4
          %v1172 = vadd.f32 %v1170, %v1171
          %v1173 = vrot.slane %v1172, 2
          %v1174 = vadd.f32 %v1172, %v1173
          %v1175 = vrot.slane %v1174, 1
          %v1176 = vadd.f32 %v1174, %v1175
          %v1177 = vadd.f32 %v919, %v925
          %v1178 = vrot.slane %v1177, 4
          %v1179 = vadd.f32 %v1177, %v1178
          %v1180 = vrot.slane %v1179, 2
          %v1181 = vadd.f32 %v1179, %v1180
          %v1182 = vrot.slane %v1181, 1
          %v1183 = vadd.f32 %v1181, %v1182
          %v1184 = vadd.f32 %v920, %v926
          %v1185 = vrot.slane %v1184, 4
          %v1186 = vadd.f32 %v1184, %v1185
          %v1187 = vrot.slane %v1186, 2
          %v1188 = vadd.f32 %v1186, %v1187
          %v1189 = vrot.slane %v1188, 1
          %v1190 = vadd.f32 %v1188, %v1189
          %v1191 = vadd.f32 %v921, %v927
          %v1192 = vrot.slane %v1191, 4
          %v1193 = vadd.f32 %v1191, %v1192
          %v1194 = vrot.slane %v1193, 2
          %v1195 = vadd.f32 %v1193, %v1194
          %v1196 = vrot.slane %v1195, 1
          %v1197 = vadd.f32 %v1195, %v1196
          %v1198 = vadd.f32 %v922, %v928
          %v1199 = vrot.slane %v1198, 4
          %v1200 = vadd.f32 %v1198, %v1199
          %v1201 = vrot.slane %v1200, 2
          %v1202 = vadd.f32 %v1200, %v1201
          %v1203 = vrot.slane %v1202, 1
          %v1204 = vadd.f32 %v1202, %v1203
          %v1205 = vadd.f32 %v929, %v935
          %v1206 = vrot.slane %v1205, 4
          %v1207 = vadd.f32 %v1205, %v1206
          %v1208 = vrot.slane %v1207, 2
          %v1209 = vadd.f32 %v1207, %v1208
          %v1210 = vrot.slane %v1209, 1
          %v1211 = vadd.f32 %v1209, %v1210
          %v1212 = vadd.f32 %v930, %v936
          %v1213 = vrot.slane %v1212, 4
          %v1214 = vadd.f32 %v1212, %v1213
          %v1215 = vrot.slane %v1214, 2
          %v1216 = vadd.f32 %v1214, %v1215
          %v1217 = vrot.slane %v1216, 1
          %v1218 = vadd.f32 %v1216, %v1217
          %v1219 = vadd.f32 %v931, %v937
          %v1220 = vrot.slane %v1219, 4
          %v1221 = vadd.f32 %v1219, %v1220
          %v1222 = vrot.slane %v1221, 2
          %v1223 = vadd.f32 %v1221, %v1222
          %v1224 = vrot.slane %v1223, 1
          %v1225 = vadd.f32 %v1223, %v1224
          %v1226 = vadd.f32 %v932, %v938
          %v1227 = vrot.slane %v1226, 4
          %v1228 = vadd.f32 %v1226, %v1227
          %v1229 = vrot.slane %v1228, 2
          %v1230 = vadd.f32 %v1228, %v1229
          %v1231 = vrot.slane %v1230, 1
          %v1232 = vadd.f32 %v1230, %v1231
          %v1233 = vadd.f32 %v933, %v939
          %v1234 = vrot.slane %v1233, 4
          %v1235 = vadd.f32 %v1233, %v1234
          %v1236 = vrot.slane %v1235, 2
          %v1237 = vadd.f32 %v1235, %v1236
          %v1238 = vrot.slane %v1237, 1
          %v1239 = vadd.f32 %v1237, %v1238
          %v1240 = vadd.f32 %v934, %v940
          %v1241 = vrot.slane %v1240, 4
          %v1242 = vadd.f32 %v1240, %v1241
          %v1243 = vrot.slane %v1242, 2
          %v1244 = vadd.f32 %v1242, %v1243
          %v1245 = vrot.slane %v1244, 1
          %v1246 = vadd.f32 %v1244, %v1245
          %v1247 = vadd.f32 %v941, %v947
          %v1248 = vrot.slane %v1247, 4
          %v1249 = vadd.f32 %v1247, %v1248
          %v1250 = vrot.slane %v1249, 2
          %v1251 = vadd.f32 %v1249, %v1250
          %v1252 = vrot.slane %v1251, 1
          %v1253 = vadd.f32 %v1251, %v1252
          %v1254 = vadd.f32 %v942, %v948
          %v1255 = vrot.slane %v1254, 4
          %v1256 = vadd.f32 %v1254, %v1255
          %v1257 = vrot.slane %v1256, 2
          %v1258 = vadd.f32 %v1256, %v1257
          %v1259 = vrot.slane %v1258, 1
          %v1260 = vadd.f32 %v1258, %v1259
          %v1261 = vadd.f32 %v943, %v949
          %v1262 = vrot.slane %v1261, 4
          %v1263 = vadd.f32 %v1261, %v1262
          %v1264 = vrot.slane %v1263, 2
          %v1265 = vadd.f32 %v1263, %v1264
          %v1266 = vrot.slane %v1265, 1
          %v1267 = vadd.f32 %v1265, %v1266
          %v1268 = vadd.f32 %v944, %v950
          %v1269 = vrot.slane %v1268, 4
          %v1270 = vadd.f32 %v1268, %v1269
          %v1271 = vrot.slane %v1270, 2
          %v1272 = vadd.f32 %v1270, %v1271
          %v1273 = vrot.slane %v1272, 1
          %v1274 = vadd.f32 %v1272, %v1273
          %v1275 = vadd.f32 %v945, %v951
          %v1276 = vrot.slane %v1275, 4
          %v1277 = vadd.f32 %v1275, %v1276
          %v1278 = vrot.slane %v1277, 2
          %v1279 = vadd.f32 %v1277, %v1278
          %v1280 = vrot.slane %v1279, 1
          %v1281 = vadd.f32 %v1279, %v1280
          %v1282 = vadd.f32 %v946, %v952
          %v1283 = vrot.slane %v1282, 4
          %v1284 = vadd.f32 %v1282, %v1283
          %v1285 = vrot.slane %v1284, 2
          %v1286 = vadd.f32 %v1284, %v1285
          %v1287 = vrot.slane %v1286, 1
          %v1288 = vadd.f32 %v1286, %v1287
          %vm1337 = vcmask 1041409
          %v1338 = vsel %vm1337, %v1001, %v959
          %vm1339 = vcmask 1042434
          %v1340 = vsel %vm1339, %v1043, %v1338
          %vm1341 = vcmask 1043459
          %v1342 = vsel %vm1341, %v1085, %v1340
          %vm1343 = vcmask 1044484
          %v1344 = vsel %vm1343, %v1127, %v1342
          %vm1345 = vcmask 1045509
          %v1346 = vsel %vm1345, %v1169, %v1344
          %vm1347 = vcmask 1046534
          %v1348 = vsel %vm1347, %v1211, %v1346
          %vm1349 = vcmask 1047559
          %v1350 = vsel %vm1349, %v1253, %v1348
          %v1351 = vsel %vm1337, %v1008, %v966
          %v1352 = vsel %vm1339, %v1050, %v1351
          %v1353 = vsel %vm1341, %v1092, %v1352
          %v1354 = vsel %vm1343, %v1134, %v1353
          %v1355 = vsel %vm1345, %v1176, %v1354
          %v1356 = vsel %vm1347, %v1218, %v1355
          %v1357 = vsel %vm1349, %v1260, %v1356
          %v1358 = vsel %vm1337, %v1015, %v973
          %v1359 = vsel %vm1339, %v1057, %v1358
          %v1360 = vsel %vm1341, %v1099, %v1359
          %v1361 = vsel %vm1343, %v1141, %v1360
          %v1362 = vsel %vm1345, %v1183, %v1361
          %v1363 = vsel %vm1347, %v1225, %v1362
          %v1364 = vsel %vm1349, %v1267, %v1363
          %v1365 = vsel %vm1337, %v1022, %v980
          %v1366 = vsel %vm1339, %v1064, %v1365
          %v1367 = vsel %vm1341, %v1106, %v1366
          %v1368 = vsel %vm1343, %v1148, %v1367
          %v1369 = vsel %vm1345, %v1190, %v1368
          %v1370 = vsel %vm1347, %v1232, %v1369
          %v1371 = vsel %vm1349, %v1274, %v1370
          %v1372 = vsel %vm1337, %v1029, %v987
          %v1373 = vsel %vm1339, %v1071, %v1372
          %v1374 = vsel %vm1341, %v1113, %v1373
          %v1375 = vsel %vm1343, %v1155, %v1374
          %v1376 = vsel %vm1345, %v1197, %v1375
          %v1377 = vsel %vm1347, %v1239, %v1376
          %v1378 = vsel %vm1349, %v1281, %v1377
          %v1379 = vsel %vm1337, %v1036, %v994
          %v1380 = vsel %vm1339, %v1078, %v1379
          %v1381 = vsel %vm1341, %v1120, %v1380
          %v1382 = vsel %vm1343, %v1162, %v1381
          %v1383 = vsel %vm1345, %v1204, %v1382
          %v1384 = vsel %vm1347, %v1246, %v1383
          %v1385 = vsel %vm1349, %v1288, %v1384
          %v1392 = vadd.f32 %v851, %v1350
          %v1393 = vadd.f32 %v852, %v1357
          %v1394 = vadd.f32 %v853, %v1364
          %v1395 = vadd.f32 %v854, %v1371
          %v1396 = vadd.f32 %v855, %v1378
          %v1397 = vadd.f32 %v856, %v1385
          %1398 = vst [vmem:[#allocation2] sm:$0xff] %v1392
          %1399 = vst [vmem:[#allocation2 + $0x8] sm:$0xff] %v1393
          %1400 = vst [vmem:[#allocation2 + $0x10] sm:$0xff] %v1394
          %1401 = vst [vmem:[#allocation2 + $0x18] sm:$0xff] %v1395
          %1402 = vst [vmem:[#allocation2 + $0x20] sm:$0xff] %v1396
          %1403 = vst [vmem:[#allocation2 + $0x28] sm:$0xff] %v1397
          %v1404 = vld [vmem:[#allocation3] sm:$0xff]
          %v1405 = vld [vmem:[#allocation3 + $0x8] sm:$0xff]
          %v1406 = vld [vmem:[#allocation3 + $0x10] sm:$0xff]
          %v1407 = vld [vmem:[#allocation3 + $0x18] sm:$0xff]
          %v1408 = vld [vmem:[#allocation3 + $0x20] sm:$0xff]
          %v1409 = vld [vmem:[#allocation3 + $0x28] sm:$0xff]
          %v1410 = vmul.f32 %v609, %v609
          %v1411 = vmul.f32 %v610, %v610
          %v1412 = vmul.f32 %v611, %v611
          %v1413 = vmul.f32 %v612, %v612
          %v1414 = vmul.f32 %v613, %v613
          %v1415 = vmul.f32 %v614, %v614
          %v1416 = vmul.f32 %v615, %v615
          %v1417 = vmul.f32 %v616, %v616
          %v1418 = vmul.f32 %v617, %v617
          %v1419 = vmul.f32 %v618, %v618
          %v1420 = vmul.f32 %v619, %v619
          %v1421 = vmul.f32 %v620, %v620
          %v1422 = vmul.f32 %v621, %v621
          %v1423 = vmul.f32 %v622, %v622
          %v1424 = vmul.f32 %v623, %v623
          %v1425 = vmul.f32 %v624, %v624
          %v1426 = vmul.f32 %v625, %v625
          %v1427 = vmul.f32 %v626, %v626
          %v1428 = vmul.f32 %v627, %v627
          %v1429 = vmul.f32 %v628, %v628
          %v1430 = vmul.f32 %v629, %v629
          %v1431 = vmul.f32 %v630, %v630
          %v1432 = vmul.f32 %v631, %v631
          %v1433 = vmul.f32 %v632, %v632
          %v1434 = vmul.f32 %v633, %v633
          %v1435 = vmul.f32 %v634, %v634
          %v1436 = vmul.f32 %v635, %v635
          %v1437 = vmul.f32 %v636, %v636
          %v1438 = vmul.f32 %v637, %v637
          %v1439 = vmul.f32 %v638, %v638
          %v1440 = vmul.f32 %v639, %v639
          %v1441 = vmul.f32 %v640, %v640
          %v1442 = vmul.f32 %v641, %v641
          %v1443 = vmul.f32 %v642, %v642
          %v1444 = vmul.f32 %v643, %v643
          %v1445 = vmul.f32 %v644, %v644
          %v1446 = vmul.f32 %v645, %v645
          %v1447 = vmul.f32 %v646, %v646
          %v1448 = vmul.f32 %v647, %v647
          %v1449 = vmul.f32 %v648, %v648
          %v1450 = vmul.f32 %v649, %v649
          %v1451 = vmul.f32 %v650, %v650
          %v1452 = vmul.f32 %v651, %v651
          %v1453 = vmul.f32 %v652, %v652
          %v1454 = vmul.f32 %v653, %v653
          %v1455 = vmul.f32 %v654, %v654
          %v1456 = vmul.f32 %v655, %v655
          %v1457 = vmul.f32 %v656, %v656
          %v1458 = vmul.f32 %v657, %v657
          %v1459 = vmul.f32 %v658, %v658
          %v1460 = vmul.f32 %v659, %v659
          %v1461 = vmul.f32 %v660, %v660
          %v1462 = vmul.f32 %v661, %v661
          %v1463 = vmul.f32 %v662, %v662
          %v1464 = vmul.f32 %v663, %v663
          %v1465 = vmul.f32 %v664, %v664
          %v1466 = vmul.f32 %v665, %v665
          %v1467 = vmul.f32 %v666, %v666
          %v1468 = vmul.f32 %v667, %v667
          %v1469 = vmul.f32 %v668, %v668
          %v1470 = vmul.f32 %v669, %v669
          %v1471 = vmul.f32 %v670, %v670
          %v1472 = vmul.f32 %v671, %v671
          %v1473 = vmul.f32 %v672, %v672
          %v1474 = vmul.f32 %v673, %v673
          %v1475 = vmul.f32 %v674, %v674
          %v1476 = vmul.f32 %v675, %v675
          %v1477 = vmul.f32 %v676, %v676
          %v1478 = vmul.f32 %v677, %v677
          %v1479 = vmul.f32 %v678, %v678
          %v1480 = vmul.f32 %v679, %v679
          %v1481 = vmul.f32 %v680, %v680
          %v1482 = vmul.f32 %v681, %v681
          %v1483 = vmul.f32 %v682, %v682
          %v1484 = vmul.f32 %v683, %v683
          %v1485 = vmul.f32 %v684, %v684
          %v1486 = vmul.f32 %v685, %v685
          %v1487 = vmul.f32 %v686, %v686
          %v1488 = vmul.f32 %v687, %v687
          %v1489 = vmul.f32 %v688, %v688
          %v1490 = vmul.f32 %v689, %v689
          %v1491 = vmul.f32 %v690, %v690
          %v1492 = vmul.f32 %v691, %v691
          %v1493 = vmul.f32 %v692, %v692
          %v1494 = vmul.f32 %v693, %v693
          %v1495 = vmul.f32 %v694, %v694
          %v1496 = vmul.f32 %v695, %v695
          %v1497 = vmul.f32 %v696, %v696
          %v1498 = vmul.f32 %v697, %v697
          %v1499 = vmul.f32 %v698, %v698
          %v1500 = vmul.f32 %v699, %v699
          %v1501 = vmul.f32 %v700, %v700
          %v1502 = vmul.f32 %v701, %v701
          %v1503 = vmul.f32 %v702, %v702
          %v1504 = vmul.f32 %v703, %v703
          %v1505 = vmul.f32 %v704, %v704
          %v1506 = vadd.f32 %v1410, %v1416
          %v1507 = vrot.slane %v1506, 4
          %v1508 = vadd.f32 %v1506, %v1507
          %v1509 = vrot.slane %v1508, 2
          %v1510 = vadd.f32 %v1508, %v1509
          %v1511 = vrot.slane %v1510, 1
          %v1512 = vadd.f32 %v1510, %v1511
          %v1513 = vadd.f32 %v1411, %v1417
          %v1514 = vrot.slane %v1513, 4
          %v1515 = vadd.f32 %v1513, %v1514
          %v1516 = vrot.slane %v1515, 2
          %v1517 = vadd.f32 %v1515, %v1516
          %v1518 = vrot.slane %v1517, 1
          %v1519 = vadd.f32 %v1517, %v1518
          %v1520 = vadd.f32 %v1412, %v1418
          %v1521 = vrot.slane %v1520, 4
          %v1522 = vadd.f32 %v1520, %v1521
          %v1523 = vrot.slane %v1522, 2
          %v1524 = vadd.f32 %v1522, %v1523
          %v1525 = vrot.slane %v1524, 1
          %v1526 = vadd.f32 %v1524, %v1525
          %v1527 = vadd.f32 %v1413, %v1419
          %v1528 = vrot.slane %v1527, 4
          %v1529 = vadd.f32 %v1527, %v1528
          %v1530 = vrot.slane %v1529, 2
          %v1531 = vadd.f32 %v1529, %v1530
          %v1532 = vrot.slane %v1531, 1
          %v1533 = vadd.f32 %v1531, %v1532
          %v1534 = vadd.f32 %v1414, %v1420
          %v1535 = vrot.slane %v1534, 4
          %v1536 = vadd.f32 %v1534, %v1535
          %v1537 = vrot.slane %v1536, 2
          %v1538 = vadd.f32 %v1536, %v1537
          %v1539 = vrot.slane %v1538, 1
          %v1540 = vadd.f32 %v1538, %v1539
          %v1541 = vadd.f32 %v1415, %v1421
          %v1542 = vrot.slane %v1541, 4
          %v1543 = vadd.f32 %v1541, %v1542
          %v1544 = vrot.slane %v1543, 2
          %v1545 = vadd.f32 %v1543, %v1544
          %v1546 = vrot.slane %v1545, 1
          %v1547 = vadd.f32 %v1545, %v1546
          %v1548 = vadd.f32 %v1422, %v1428
          %v1549 = vrot.slane %v1548, 4
          %v1550 = vadd.f32 %v1548, %v1549
          %v1551 = vrot.slane %v1550, 2
          %v1552 = vadd.f32 %v1550, %v1551
          %v1553 = vrot.slane %v1552, 1
          %v1554 = vadd.f32 %v1552, %v1553
          %v1555 = vadd.f32 %v1423, %v1429
          %v1556 = vrot.slane %v1555, 4
          %v1557 = vadd.f32 %v1555, %v1556
          %v1558 = vrot.slane %v1557, 2
          %v1559 = vadd.f32 %v1557, %v1558
          %v1560 = vrot.slane %v1559, 1
          %v1561 = vadd.f32 %v1559, %v1560
          %v1562 = vadd.f32 %v1424, %v1430
          %v1563 = vrot.slane %v1562, 4
          %v1564 = vadd.f32 %v1562, %v1563
          %v1565 = vrot.slane %v1564, 2
          %v1566 = vadd.f32 %v1564, %v1565
          %v1567 = vrot.slane %v1566, 1
          %v1568 = vadd.f32 %v1566, %v1567
          %v1569 = vadd.f32 %v1425, %v1431
          %v1570 = vrot.slane %v1569, 4
          %v1571 = vadd.f32 %v1569, %v1570
          %v1572 = vrot.slane %v1571, 2
          %v1573 = vadd.f32 %v1571, %v1572
          %v1574 = vrot.slane %v1573, 1
          %v1575 = vadd.f32 %v1573, %v1574
          %v1576 = vadd.f32 %v1426, %v1432
          %v1577 = vrot.slane %v1576, 4
          %v1578 = vadd.f32 %v1576, %v1577
          %v1579 = vrot.slane %v1578, 2
          %v1580 = vadd.f32 %v1578, %v1579
          %v1581 = vrot.slane %v1580, 1
          %v1582 = vadd.f32 %v1580, %v1581
          %v1583 = vadd.f32 %v1427, %v1433
          %v1584 = vrot.slane %v1583, 4
          %v1585 = vadd.f32 %v1583, %v1584
          %v1586 = vrot.slane %v1585, 2
          %v1587 = vadd.f32 %v1585, %v1586
          %v1588 = vrot.slane %v1587, 1
          %v1589 = vadd.f32 %v1587, %v1588
          %v1590 = vadd.f32 %v1434, %v1440
          %v1591 = vrot.slane %v1590, 4
          %v1592 = vadd.f32 %v1590, %v1591
          %v1593 = vrot.slane %v1592, 2
          %v1594 = vadd.f32 %v1592, %v1593
          %v1595 = vrot.slane %v1594, 1
          %v1596 = vadd.f32 %v1594, %v1595
          %v1597 = vadd.f32 %v1435, %v1441
          %v1598 = vrot.slane %v1597, 4
          %v1599 = vadd.f32 %v1597, %v1598
          %v1600 = vrot.slane %v1599, 2
          %v1601 = vadd.f32 %v1599, %v1600
          %v1602 = vrot.slane %v1601, 1
          %v1603 = vadd.f32 %v1601, %v1602
          %v1604 = vadd.f32 %v1436, %v1442
          %v1605 = vrot.slane %v1604, 4
          %v1606 = vadd.f32 %v1604, %v1605
          %v1607 = vrot.slane %v1606, 2
          %v1608 = vadd.f32 %v1606, %v1607
          %v1609 = vrot.slane %v1608, 1
          %v1610 = vadd.f32 %v1608, %v1609
          %v1611 = vadd.f32 %v1437, %v1443
          %v1612 = vrot.slane %v1611, 4
          %v1613 = vadd.f32 %v1611, %v1612
          %v1614 = vrot.slane %v1613, 2
          %v1615 = vadd.f32 %v1613, %v1614
          %v1616 = vrot.slane %v1615, 1
          %v1617 = vadd.f32 %v1615, %v1616
          %v1618 = vadd.f32 %v1438, %v1444
          %v1619 = vrot.slane %v1618, 4
          %v1620 = vadd.f32 %v1618, %v1619
          %v1621 = vrot.slane %v1620, 2
          %v1622 = vadd.f32 %v1620, %v1621
          %v1623 = vrot.slane %v1622, 1
          %v1624 = vadd.f32 %v1622, %v1623
          %v1625 = vadd.f32 %v1439, %v1445
          %v1626 = vrot.slane %v1625, 4
          %v1627 = vadd.f32 %v1625, %v1626
          %v1628 = vrot.slane %v1627, 2
          %v1629 = vadd.f32 %v1627, %v1628
          %v1630 = vrot.slane %v1629, 1
          %v1631 = vadd.f32 %v1629, %v1630
          %v1632 = vadd.f32 %v1446, %v1452
          %v1633 = vrot.slane %v1632, 4
          %v1634 = vadd.f32 %v1632, %v1633
          %v1635 = vrot.slane %v1634, 2
          %v1636 = vadd.f32 %v1634, %v1635
          %v1637 = vrot.slane %v1636, 1
          %v1638 = vadd.f32 %v1636, %v1637
          %v1639 = vadd.f32 %v1447, %v1453
          %v1640 = vrot.slane %v1639, 4
          %v1641 = vadd.f32 %v1639, %v1640
          %v1642 = vrot.slane %v1641, 2
          %v1643 = vadd.f32 %v1641, %v1642
          %v1644 = vrot.slane %v1643, 1
          %v1645 = vadd.f32 %v1643, %v1644
          %v1646 = vadd.f32 %v1448, %v1454
          %v1647 = vrot.slane %v1646, 4
          %v1648 = vadd.f32 %v1646, %v1647
          %v1649 = vrot.slane %v1648, 2
          %v1650 = vadd.f32 %v1648, %v1649
          %v1651 = vrot.slane %v1650, 1
          %v1652 = vadd.f32 %v1650, %v1651
          %v1653 = vadd.f32 %v1449, %v1455
          %v1654 = vrot.slane %v1653, 4
          %v1655 = vadd.f32 %v1653, %v1654
          %v1656 = vrot.slane %v1655, 2
          %v1657 = vadd.f32 %v1655, %v1656
          %v1658 = vrot.slane %v1657, 1
          %v1659 = vadd.f32 %v1657, %v1658
          %v1660 = vadd.f32 %v1450, %v1456
          %v1661 = vrot.slane %v1660, 4
          %v1662 = vadd.f32 %v1660, %v1661
          %v1663 = vrot.slane %v1662, 2
          %v1664 = vadd.f32 %v1662, %v1663
          %v1665 = vrot.slane %v1664, 1
          %v1666 = vadd.f32 %v1664, %v1665
          %v1667 = vadd.f32 %v1451, %v1457
          %v1668 = vrot.slane %v1667, 4
          %v1669 = vadd.f32 %v1667, %v1668
          %v1670 = vrot.slane %v1669, 2
          %v1671 = vadd.f32 %v1669, %v1670
          %v1672 = vrot.slane %v1671, 1
          %v1673 = vadd.f32 %v1671, %v1672
          %v1674 = vadd.f32 %v1458, %v1464
          %v1675 = vrot.slane %v1674, 4
          %v1676 = vadd.f32 %v1674, %v1675
          %v1677 = vrot.slane %v1676, 2
          %v1678 = vadd.f32 %v1676, %v1677
          %v1679 = vrot.slane %v1678, 1
          %v1680 = vadd.f32 %v1678, %v1679
          %v1681 = vadd.f32 %v1459, %v1465
          %v1682 = vrot.slane %v1681, 4
          %v1683 = vadd.f32 %v1681, %v1682
          %v1684 = vrot.slane %v1683, 2
          %v1685 = vadd.f32 %v1683, %v1684
          %v1686 = vrot.slane %v1685, 1
          %v1687 = vadd.f32 %v1685, %v1686
          %v1688 = vadd.f32 %v1460, %v1466
          %v1689 = vrot.slane %v1688, 4
          %v1690 = vadd.f32 %v1688, %v1689
          %v1691 = vrot.slane %v1690, 2
          %v1692 = vadd.f32 %v1690, %v1691
          %v1693 = vrot.slane %v1692, 1
          %v1694 = vadd.f32 %v1692, %v1693
          %v1695 = vadd.f32 %v1461, %v1467
          %v1696 = vrot.slane %v1695, 4
          %v1697 = vadd.f32 %v1695, %v1696
          %v1698 = vrot.slane %v1697, 2
          %v1699 = vadd.f32 %v1697, %v1698
          %v1700 = vrot.slane %v1699, 1
          %v1701 = vadd.f32 %v1699, %v1700
          %v1702 = vadd.f32 %v1462, %v1468
          %v1703 = vrot.slane %v1702, 4
          %v1704 = vadd.f32 %v1702, %v1703
          %v1705 = vrot.slane %v1704, 2
          %v1706 = vadd.f32 %v1704, %v1705
          %v1707 = vrot.slane %v1706, 1
          %v1708 = vadd.f32 %v1706, %v1707
          %v1709 = vadd.f32 %v1463, %v1469
          %v1710 = vrot.slane %v1709, 4
          %v1711 = vadd.f32 %v1709, %v1710
          %v1712 = vrot.slane %v1711, 2
          %v1713 = vadd.f32 %v1711, %v1712
          %v1714 = vrot.slane %v1713, 1
          %v1715 = vadd.f32 %v1713, %v1714
          %v1716 = vadd.f32 %v1470, %v1476
          %v1717 = vrot.slane %v1716, 4
          %v1718 = vadd.f32 %v1716, %v1717
          %v1719 = vrot.slane %v1718, 2
          %v1720 = vadd.f32 %v1718, %v1719
          %v1721 = vrot.slane %v1720, 1
          %v1722 = vadd.f32 %v1720, %v1721
          %v1723 = vadd.f32 %v1471, %v1477
          %v1724 = vrot.slane %v1723, 4
          %v1725 = vadd.f32 %v1723, %v1724
          %v1726 = vrot.slane %v1725, 2
          %v1727 = vadd.f32 %v1725, %v1726
          %v1728 = vrot.slane %v1727, 1
          %v1729 = vadd.f32 %v1727, %v1728
          %v1730 = vadd.f32 %v1472, %v1478
          %v1731 = vrot.slane %v1730, 4
          %v1732 = vadd.f32 %v1730, %v1731
          %v1733 = vrot.slane %v1732, 2
          %v1734 = vadd.f32 %v1732, %v1733
          %v1735 = vrot.slane %v1734, 1
          %v1736 = vadd.f32 %v1734, %v1735
          %v1737 = vadd.f32 %v1473, %v1479
          %v1738 = vrot.slane %v1737, 4
          %v1739 = vadd.f32 %v1737, %v1738
          %v1740 = vrot.slane %v1739, 2
          %v1741 = vadd.f32 %v1739, %v1740
          %v1742 = vrot.slane %v1741, 1
          %v1743 = vadd.f32 %v1741, %v1742
          %v1744 = vadd.f32 %v1474, %v1480
          %v1745 = vrot.slane %v1744, 4
          %v1746 = vadd.f32 %v1744, %v1745
          %v1747 = vrot.slane %v1746, 2
          %v1748 = vadd.f32 %v1746, %v1747
          %v1749 = vrot.slane %v1748, 1
          %v1750 = vadd.f32 %v1748, %v1749
          %v1751 = vadd.f32 %v1475, %v1481
          %v1752 = vrot.slane %v1751, 4
          %v1753 = vadd.f32 %v1751, %v1752
          %v1754 = vrot.slane %v1753, 2
          %v1755 = vadd.f32 %v1753, %v1754
          %v1756 = vrot.slane %v1755, 1
          %v1757 = vadd.f32 %v1755, %v1756
          %v1758 = vadd.f32 %v1482, %v1488
          %v1759 = vrot.slane %v1758, 4
          %v1760 = vadd.f32 %v1758, %v1759
          %v1761 = vrot.slane %v1760, 2
          %v1762 = vadd.f32 %v1760, %v1761
          %v1763 = vrot.slane %v1762, 1
          %v1764 = vadd.f32 %v1762, %v1763
          %v1765 = vadd.f32 %v1483, %v1489
          %v1766 = vrot.slane %v1765, 4
          %v1767 = vadd.f32 %v1765, %v1766
          %v1768 = vrot.slane %v1767, 2
          %v1769 = vadd.f32 %v1767, %v1768
          %v1770 = vrot.slane %v1769, 1
          %v1771 = vadd.f32 %v1769, %v1770
          %v1772 = vadd.f32 %v1484, %v1490
          %v1773 = vrot.slane %v1772, 4
          %v1774 = vadd.f32 %v1772, %v1773
          %v1775 = vrot.slane %v1774, 2
          %v1776 = vadd.f32 %v1774, %v1775
          %v1777 = vrot.slane %v1776, 1
          %v1778 = vadd.f32 %v1776, %v1777
          %v1779 = vadd.f32 %v1485, %v1491
          %v1780 = vrot.slane %v1779, 4
          %v1781 = vadd.f32 %v1779, %v1780
          %v1782 = vrot.slane %v1781, 2
          %v1783 = vadd.f32 %v1781, %v1782
          %v1784 = vrot.slane %v1783, 1
          %v1785 = vadd.f32 %v1783, %v1784
          %v1786 = vadd.f32 %v1486, %v1492
          %v1787 = vrot.slane %v1786, 4
          %v1788 = vadd.f32 %v1786, %v1787
          %v1789 = vrot.slane %v1788, 2
          %v1790 = vadd.f32 %v1788, %v1789
          %v1791 = vrot.slane %v1790, 1
          %v1792 = vadd.f32 %v1790, %v1791
          %v1793 = vadd.f32 %v1487, %v1493
          %v1794 = vrot.slane %v1793, 4
          %v1795 = vadd.f32 %v1793, %v1794
          %v1796 = vrot.slane %v1795, 2
          %v1797 = vadd.f32 %v1795, %v1796
          %v1798 = vrot.slane %v1797, 1
          %v1799 = vadd.f32 %v1797, %v1798
          %v1800 = vadd.f32 %v1494, %v1500
          %v1801 = vrot.slane %v1800, 4
          %v1802 = vadd.f32 %v1800, %v1801
          %v1803 = vrot.slane %v1802, 2
          %v1804 = vadd.f32 %v1802, %v1803
          %v1805 = vrot.slane %v1804, 1
          %v1806 = vadd.f32 %v1804, %v1805
          %v1807 = vadd.f32 %v1495, %v1501
          %v1808 = vrot.slane %v1807, 4
          %v1809 = vadd.f32 %v1807, %v1808
          %v1810 = vrot.slane %v1809, 2
          %v1811 = vadd.f32 %v1809, %v1810
          %v1812 = vrot.slane %v1811, 1
          %v1813 = vadd.f32 %v1811, %v1812
          %v1814 = vadd.f32 %v1496, %v1502
          %v1815 = vrot.slane %v1814, 4
          %v1816 = vadd.f32 %v1814, %v1815
          %v1817 = vrot.slane %v1816, 2
          %v1818 = vadd.f32 %v1816, %v1817
          %v1819 = vrot.slane %v1818, 1
          %v1820 = vadd.f32 %v1818, %v1819
          %v1821 = vadd.f32 %v1497, %v1503
          %v1822 = vrot.slane %v1821, 4
          %v1823 = vadd.f32 %v1821, %v1822
          %v1824 = vrot.slane %v1823, 2
          %v1825 = vadd.f32 %v1823, %v1824
          %v1826 = vrot.slane %v1825, 1
          %v1827 = vadd.f32 %v1825, %v1826
          %v1828 = vadd.f32 %v1498, %v1504
          %v1829 = vrot.slane %v1828, 4
          %v1830 = vadd.f32 %v1828, %v1829
          %v1831 = vrot.slane %v1830, 2
          %v1832 = vadd.f32 %v1830, %v1831
          %v1833 = vrot.slane %v1832, 1
          %v1834 = vadd.f32 %v1832, %v1833
          %v1835 = vadd.f32 %v1499, %v1505
          %v1836 = vrot.slane %v1835, 4
          %v1837 = vadd.f32 %v1835, %v1836
          %v1838 = vrot.slane %v1837, 2
          %v1839 = vadd.f32 %v1837, %v1838
          %v1840 = vrot.slane %v1839, 1
          %v1841 = vadd.f32 %v1839, %v1840
          %v1890 = vsel %vm1337, %v1554, %v1512
          %v1891 = vsel %vm1339, %v1596, %v1890
          %v1892 = vsel %vm1341, %v1638, %v1891
          %v1893 = vsel %vm1343, %v1680, %v1892
          %v1894 = vsel %vm1345, %v1722, %v1893
          %v1895 = vsel %vm1347, %v1764, %v1894
          %v1896 = vsel %vm1349, %v1806, %v1895
          %v1897 = vsel %vm1337, %v1561, %v1519
          %v1898 = vsel %vm1339, %v1603, %v1897
          %v1899 = vsel %vm1341, %v1645, %v1898
          %v1900 = vsel %vm1343, %v1687, %v1899
          %v1901 = vsel %vm1345, %v1729, %v1900
          %v1902 = vsel %vm1347, %v1771, %v1901
          %v1903 = vsel %vm1349, %v1813, %v1902
          %v1904 = vsel %vm1337, %v1568, %v1526
          %v1905 = vsel %vm1339, %v1610, %v1904
          %v1906 = vsel %vm1341, %v1652, %v1905
          %v1907 = vsel %vm1343, %v1694, %v1906
          %v1908 = vsel %vm1345, %v1736, %v1907
          %v1909 = vsel %vm1347, %v1778, %v1908
          %v1910 = vsel %vm1349, %v1820, %v1909
          %v1911 = vsel %vm1337, %v1575, %v1533
          %v1912 = vsel %vm1339, %v1617, %v1911
          %v1913 = vsel %vm1341, %v1659, %v1912
          %v1914 = vsel %vm1343, %v1701, %v1913
          %v1915 = vsel %vm1345, %v1743, %v1914
          %v1916 = vsel %vm1347, %v1785, %v1915
          %v1917 = vsel %vm1349, %v1827, %v1916
          %v1918 = vsel %vm1337, %v1582, %v1540
          %v1919 = vsel %vm1339, %v1624, %v1918
          %v1920 = vsel %vm1341, %v1666, %v1919
          %v1921 = vsel %vm1343, %v1708, %v1920
          %v1922 = vsel %vm1345, %v1750, %v1921
          %v1923 = vsel %vm1347, %v1792, %v1922
          %v1924 = vsel %vm1349, %v1834, %v1923
          %v1925 = vsel %vm1337, %v1589, %v1547
          %v1926 = vsel %vm1339, %v1631, %v1925
          %v1927 = vsel %vm1341, %v1673, %v1926
          %v1928 = vsel %vm1343, %v1715, %v1927
          %v1929 = vsel %vm1345, %v1757, %v1928
          %v1930 = vsel %vm1347, %v1799, %v1929
          %v1931 = vsel %vm1349, %v1841, %v1930
          %v1938 = vadd.f32 %v1404, %v1896
          %v1939 = vadd.f32 %v1405, %v1903
          %v1940 = vadd.f32 %v1406, %v1910
          %v1941 = vadd.f32 %v1407, %v1917
          %v1942 = vadd.f32 %v1408, %v1924
          %v1943 = vadd.f32 %v1409, %v1931
          %1944 = vst [vmem:[#allocation3] sm:$0xff] %v1938
          %1945 = vst [vmem:[#allocation3 + $0x8] sm:$0xff] %v1939
          %1946 = vst [vmem:[#allocation3 + $0x10] sm:$0xff] %v1940
          %1947 = vst [vmem:[#allocation3 + $0x18] sm:$0xff] %v1941
          %1948 = vst [vmem:[#allocation3 + $0x20] sm:$0xff] %v1942
          %1949 = vst [vmem:[#allocation3 + $0x28] sm:$0xff] %v1943
        $region101: #{tpu_custom_call.1} parent=55 // loop_footer
          %s554 = sadd.s32 1, %s550
        $region102: #{tpu_custom_call.1} parent=55 // loop_footer_branch
          %549 = sbr.rel target = $region98
        $region103: #{tpu_custom_call.1} parent=55 // loop_exit
          _
        // Predicated region
        $region104: #{tpu_custom_call.1} parent=55 // pred_check
          %p1950 = pneg %p533
        $region105: #{tpu_custom_call.1} parent=55 // pred_check_branch
          %1952 = sbr.rel (%p1950) target = $region107
        $region106: #{tpu_custom_call.1} parent=55 // pred_region
          %v1953 = vld [vmem:[#allocation3] sm:$0xff]
          %v1954 = vld [vmem:[#allocation3 + $0x8] sm:$0xff]
          %v1955 = vld [vmem:[#allocation3 + $0x10] sm:$0xff]
          %v1956 = vld [vmem:[#allocation3 + $0x18] sm:$0xff]
          %v1957 = vld [vmem:[#allocation3 + $0x20] sm:$0xff]
          %v1958 = vld [vmem:[#allocation3 + $0x28] sm:$0xff]
          %v1959 = vld [vmem:[%s460] sm:$0xff]
          %v1960 = vld [vmem:[%s460 + $0x8] sm:$0xff]
          %v1961 = vld [vmem:[%s460 + $0x10] sm:$0xff]
          %v1962 = vld [vmem:[%s460 + $0x18] sm:$0xff]
          %v1963 = vld [vmem:[%s460 + $0x20] sm:$0xff]
          %v1964 = vld [vmem:[%s460 + $0x28] sm:$0xff]
          %v1965 = vmul.f32 %v1953, %v1959
          %v1966 = vmul.f32 %v1954, %v1960
          %v1967 = vmul.f32 %v1955, %v1961
          %v1968 = vmul.f32 %v1956, %v1962
          %v1969 = vmul.f32 %v1957, %v1963
          %v1970 = vmul.f32 %v1958, %v1964
          %v1971 = vmax.f32 %v1965, 1e-12
          %v1972 = vmax.f32 %v1966, 1e-12
          %v1973 = vmax.f32 %v1967, 1e-12
          %v1974 = vmax.f32 %v1968, 1e-12
          %v1975 = vmax.f32 %v1969, 1e-12
          %v1976 = vmax.f32 %v1970, 1e-12
          %v1977 = vld [vmem:[#allocation2] sm:$0xff]
          %v1978 = vld [vmem:[#allocation2 + $0x8] sm:$0xff]
          %v1979 = vld [vmem:[#allocation2 + $0x10] sm:$0xff]
          %v1980 = vld [vmem:[#allocation2 + $0x18] sm:$0xff]
          %v1981 = vld [vmem:[#allocation2 + $0x20] sm:$0xff]
          %v1982 = vld [vmem:[#allocation2 + $0x28] sm:$0xff]
          %v1983 = vrsqrt.pop %v1971
          %v1984 = vrsqrt.pop %v1972
          %v1985 = vrsqrt.pop %v1973
          %v1986 = vrsqrt.pop %v1974
          %v1987 = vrsqrt.pop %v1975
          %v1988 = vrsqrt.pop %v1976
          %v1989 = vmul.f32 %v1977, %v1983
          %v1990 = vmul.f32 %v1978, %v1984
          %v1991 = vmul.f32 %v1979, %v1985
          %v1992 = vmul.f32 %v1980, %v1986
          %v1993 = vmul.f32 %v1981, %v1987
          %v1994 = vmul.f32 %v1982, %v1988
          %v1995 = vld [vmem:[#allocation10] sm:$0xff]
          %v1996 = vld [vmem:[#allocation10 + $0x8] sm:$0xff]
          %v1997 = vld [vmem:[#allocation10 + $0x10] sm:$0xff]
          %v1998 = vld [vmem:[#allocation10 + $0x18] sm:$0xff]
          %v1999 = vld [vmem:[#allocation10 + $0x20] sm:$0xff]
          %v2000 = vld [vmem:[#allocation10 + $0x28] sm:$0xff]
          %v2001 = vld [vmem:[#allocation10 + $0x30] sm:$0xff]
          %v2002 = vld [vmem:[#allocation10 + $0x38] sm:$0xff]
          %v2003 = vld [vmem:[#allocation10 + $0x40] sm:$0xff]
          %v2004 = vld [vmem:[#allocation10 + $0x48] sm:$0xff]
          %v2005 = vld [vmem:[#allocation10 + $0x50] sm:$0xff]
          %v2006 = vld [vmem:[#allocation10 + $0x58] sm:$0xff]
          %v2007 = vld [vmem:[#allocation10 + $0x60] sm:$0xff]
          %v2008 = vld [vmem:[#allocation10 + $0x68] sm:$0xff]
          %v2009 = vld [vmem:[#allocation10 + $0x70] sm:$0xff]
          %v2010 = vld [vmem:[#allocation10 + $0x78] sm:$0xff]
          %v2011 = vld [vmem:[#allocation10 + $0x80] sm:$0xff]
          %v2012 = vld [vmem:[#allocation10 + $0x88] sm:$0xff]
          %v2013 = vld [vmem:[#allocation10 + $0x90] sm:$0xff]
          %v2014 = vld [vmem:[#allocation10 + $0x98] sm:$0xff]
          %v2015 = vld [vmem:[#allocation10 + $0xa0] sm:$0xff]
          %v2016 = vld [vmem:[#allocation10 + $0xa8] sm:$0xff]
          %v2017 = vld [vmem:[#allocation10 + $0xb0] sm:$0xff]
          %v2018 = vld [vmem:[#allocation10 + $0xb8] sm:$0xff]
          %v2019 = vld [vmem:[#allocation10 + $0xc0] sm:$0xff]
          %v2020 = vld [vmem:[#allocation10 + $0xc8] sm:$0xff]
          %v2021 = vld [vmem:[#allocation10 + $0xd0] sm:$0xff]
          %v2022 = vld [vmem:[#allocation10 + $0xd8] sm:$0xff]
          %v2023 = vld [vmem:[#allocation10 + $0xe0] sm:$0xff]
          %v2024 = vld [vmem:[#allocation10 + $0xe8] sm:$0xff]
          %v2025 = vld [vmem:[#allocation10 + $0xf0] sm:$0xff]
          %v2026 = vld [vmem:[#allocation10 + $0xf8] sm:$0xff]
          %v2027 = vld [vmem:[#allocation10 + $0x100] sm:$0xff]
          %v2028 = vld [vmem:[#allocation10 + $0x108] sm:$0xff]
          %v2029 = vld [vmem:[#allocation10 + $0x110] sm:$0xff]
          %v2030 = vld [vmem:[#allocation10 + $0x118] sm:$0xff]
          %v2031 = vld [vmem:[#allocation10 + $0x120] sm:$0xff]
          %v2032 = vld [vmem:[#allocation10 + $0x128] sm:$0xff]
          %v2033 = vld [vmem:[#allocation10 + $0x130] sm:$0xff]
          %v2034 = vld [vmem:[#allocation10 + $0x138] sm:$0xff]
          %v2035 = vld [vmem:[#allocation10 + $0x140] sm:$0xff]
          %v2036 = vld [vmem:[#allocation10 + $0x148] sm:$0xff]
          %v2037 = vld [vmem:[#allocation10 + $0x150] sm:$0xff]
          %v2038 = vld [vmem:[#allocation10 + $0x158] sm:$0xff]
          %v2039 = vld [vmem:[#allocation10 + $0x160] sm:$0xff]
          %v2040 = vld [vmem:[#allocation10 + $0x168] sm:$0xff]
          %v2041 = vld [vmem:[#allocation10 + $0x170] sm:$0xff]
          %v2042 = vld [vmem:[#allocation10 + $0x178] sm:$0xff]
          %v2043 = vld [vmem:[#allocation10 + $0x180] sm:$0xff]
          %v2044 = vld [vmem:[#allocation10 + $0x188] sm:$0xff]
          %v2045 = vld [vmem:[#allocation10 + $0x190] sm:$0xff]
          %v2046 = vld [vmem:[#allocation10 + $0x198] sm:$0xff]
          %v2047 = vld [vmem:[#allocation10 + $0x1a0] sm:$0xff]
          %v2048 = vld [vmem:[#allocation10 + $0x1a8] sm:$0xff]
          %v2049 = vld [vmem:[#allocation10 + $0x1b0] sm:$0xff]
          %v2050 = vld [vmem:[#allocation10 + $0x1b8] sm:$0xff]
          %v2051 = vld [vmem:[#allocation10 + $0x1c0] sm:$0xff]
          %v2052 = vld [vmem:[#allocation10 + $0x1c8] sm:$0xff]
          %v2053 = vld [vmem:[#allocation10 + $0x1d0] sm:$0xff]
          %v2054 = vld [vmem:[#allocation10 + $0x1d8] sm:$0xff]
          %v2055 = vld [vmem:[#allocation10 + $0x1e0] sm:$0xff]
          %v2056 = vld [vmem:[#allocation10 + $0x1e8] sm:$0xff]
          %v2057 = vld [vmem:[#allocation10 + $0x1f0] sm:$0xff]
          %v2058 = vld [vmem:[#allocation10 + $0x1f8] sm:$0xff]
          %v2059 = vld [vmem:[#allocation10 + $0x200] sm:$0xff]
          %v2060 = vld [vmem:[#allocation10 + $0x208] sm:$0xff]
          %v2061 = vld [vmem:[#allocation10 + $0x210] sm:$0xff]
          %v2062 = vld [vmem:[#allocation10 + $0x218] sm:$0xff]
          %v2063 = vld [vmem:[#allocation10 + $0x220] sm:$0xff]
          %v2064 = vld [vmem:[#allocation10 + $0x228] sm:$0xff]
          %v2065 = vld [vmem:[#allocation10 + $0x230] sm:$0xff]
          %v2066 = vld [vmem:[#allocation10 + $0x238] sm:$0xff]
          %v2067 = vld [vmem:[#allocation10 + $0x240] sm:$0xff]
          %v2068 = vld [vmem:[#allocation10 + $0x248] sm:$0xff]
          %v2069 = vld [vmem:[#allocation10 + $0x250] sm:$0xff]
          %v2070 = vld [vmem:[#allocation10 + $0x258] sm:$0xff]
          %v2071 = vld [vmem:[#allocation10 + $0x260] sm:$0xff]
          %v2072 = vld [vmem:[#allocation10 + $0x268] sm:$0xff]
          %v2073 = vld [vmem:[#allocation10 + $0x270] sm:$0xff]
          %v2074 = vld [vmem:[#allocation10 + $0x278] sm:$0xff]
          %v2075 = vld [vmem:[#allocation10 + $0x280] sm:$0xff]
          %v2076 = vld [vmem:[#allocation10 + $0x288] sm:$0xff]
          %v2077 = vld [vmem:[#allocation10 + $0x290] sm:$0xff]
          %v2078 = vld [vmem:[#allocation10 + $0x298] sm:$0xff]
          %v2079 = vld [vmem:[#allocation10 + $0x2a0] sm:$0xff]
          %v2080 = vld [vmem:[#allocation10 + $0x2a8] sm:$0xff]
          %v2081 = vld [vmem:[#allocation10 + $0x2b0] sm:$0xff]
          %v2082 = vld [vmem:[#allocation10 + $0x2b8] sm:$0xff]
          %v2083 = vld [vmem:[#allocation10 + $0x2c0] sm:$0xff]
          %v2084 = vld [vmem:[#allocation10 + $0x2c8] sm:$0xff]
          %v2085 = vld [vmem:[#allocation10 + $0x2d0] sm:$0xff]
          %v2086 = vld [vmem:[#allocation10 + $0x2d8] sm:$0xff]
          %v2087 = vld [vmem:[#allocation10 + $0x2e0] sm:$0xff]
          %v2088 = vld [vmem:[#allocation10 + $0x2e8] sm:$0xff]
          %v2089 = vld [vmem:[#allocation10 + $0x2f0] sm:$0xff]
          %v2090 = vld [vmem:[#allocation10 + $0x2f8] sm:$0xff]
          %v2091 = vld [vmem:[#allocation10 + $0x300] sm:$0xff]
          %v2092 = vld [vmem:[#allocation10 + $0x308] sm:$0xff]
          %v2093 = vld [vmem:[#allocation10 + $0x310] sm:$0xff]
          %v2094 = vld [vmem:[#allocation10 + $0x318] sm:$0xff]
          %v2095 = vld [vmem:[#allocation10 + $0x320] sm:$0xff]
          %v2096 = vld [vmem:[#allocation10 + $0x328] sm:$0xff]
          %v2097 = vld [vmem:[#allocation10 + $0x330] sm:$0xff]
          %v2098 = vld [vmem:[#allocation10 + $0x338] sm:$0xff]
          %v2099 = vld [vmem:[#allocation10 + $0x340] sm:$0xff]
          %v2100 = vld [vmem:[#allocation10 + $0x348] sm:$0xff]
          %v2101 = vld [vmem:[#allocation10 + $0x350] sm:$0xff]
          %v2102 = vld [vmem:[#allocation10 + $0x358] sm:$0xff]
          %v2103 = vld [vmem:[#allocation10 + $0x360] sm:$0xff]
          %v2104 = vld [vmem:[#allocation10 + $0x368] sm:$0xff]
          %v2105 = vld [vmem:[#allocation10 + $0x370] sm:$0xff]
          %v2106 = vld [vmem:[#allocation10 + $0x378] sm:$0xff]
          %v2107 = vld [vmem:[#allocation10 + $0x380] sm:$0xff]
          %v2108 = vld [vmem:[#allocation10 + $0x388] sm:$0xff]
          %v2109 = vld [vmem:[#allocation10 + $0x390] sm:$0xff]
          %v2110 = vld [vmem:[#allocation10 + $0x398] sm:$0xff]
          %v2111 = vld [vmem:[#allocation10 + $0x3a0] sm:$0xff]
          %v2112 = vld [vmem:[#allocation10 + $0x3a8] sm:$0xff]
          %v2113 = vld [vmem:[#allocation10 + $0x3b0] sm:$0xff]
          %v2114 = vld [vmem:[#allocation10 + $0x3b8] sm:$0xff]
          %v2115 = vld [vmem:[#allocation10 + $0x3c0] sm:$0xff]
          %v2116 = vld [vmem:[#allocation10 + $0x3c8] sm:$0xff]
          %v2117 = vld [vmem:[#allocation10 + $0x3d0] sm:$0xff]
          %v2118 = vld [vmem:[#allocation10 + $0x3d8] sm:$0xff]
          %v2119 = vld [vmem:[#allocation10 + $0x3e0] sm:$0xff]
          %v2120 = vld [vmem:[#allocation10 + $0x3e8] sm:$0xff]
          %v2121 = vld [vmem:[#allocation10 + $0x3f0] sm:$0xff]
          %v2122 = vld [vmem:[#allocation10 + $0x3f8] sm:$0xff]
          %v2123 = vld [vmem:[#allocation10 + $0x400] sm:$0xff]
          %v2124 = vld [vmem:[#allocation10 + $0x408] sm:$0xff]
          %v2125 = vld [vmem:[#allocation10 + $0x410] sm:$0xff]
          %v2126 = vld [vmem:[#allocation10 + $0x418] sm:$0xff]
          %v2127 = vld [vmem:[#allocation10 + $0x420] sm:$0xff]
          %v2128 = vld [vmem:[#allocation10 + $0x428] sm:$0xff]
          %v2129 = vld [vmem:[#allocation10 + $0x430] sm:$0xff]
          %v2130 = vld [vmem:[#allocation10 + $0x438] sm:$0xff]
          %v2131 = vld [vmem:[#allocation10 + $0x440] sm:$0xff]
          %v2132 = vld [vmem:[#allocation10 + $0x448] sm:$0xff]
          %v2133 = vld [vmem:[#allocation10 + $0x450] sm:$0xff]
          %v2134 = vld [vmem:[#allocation10 + $0x458] sm:$0xff]
          %v2135 = vld [vmem:[#allocation10 + $0x460] sm:$0xff]
          %v2136 = vld [vmem:[#allocation10 + $0x468] sm:$0xff]
          %v2137 = vld [vmem:[#allocation10 + $0x470] sm:$0xff]
          %v2138 = vld [vmem:[#allocation10 + $0x478] sm:$0xff]
          %v2139 = vld [vmem:[#allocation10 + $0x480] sm:$0xff]
          %v2140 = vld [vmem:[#allocation10 + $0x488] sm:$0xff]
          %v2141 = vld [vmem:[#allocation10 + $0x490] sm:$0xff]
          %v2142 = vld [vmem:[#allocation10 + $0x498] sm:$0xff]
          %v2143 = vld [vmem:[#allocation10 + $0x4a0] sm:$0xff]
          %v2144 = vld [vmem:[#allocation10 + $0x4a8] sm:$0xff]
          %v2145 = vld [vmem:[#allocation10 + $0x4b0] sm:$0xff]
          %v2146 = vld [vmem:[#allocation10 + $0x4b8] sm:$0xff]
          %v2147 = vld [vmem:[#allocation10 + $0x4c0] sm:$0xff]
          %v2148 = vld [vmem:[#allocation10 + $0x4c8] sm:$0xff]
          %v2149 = vld [vmem:[#allocation10 + $0x4d0] sm:$0xff]
          %v2150 = vld [vmem:[#allocation10 + $0x4d8] sm:$0xff]
          %v2151 = vld [vmem:[#allocation10 + $0x4e0] sm:$0xff]
          %v2152 = vld [vmem:[#allocation10 + $0x4e8] sm:$0xff]
          %v2153 = vld [vmem:[#allocation10 + $0x4f0] sm:$0xff]
          %v2154 = vld [vmem:[#allocation10 + $0x4f8] sm:$0xff]
          %v2155 = vld [vmem:[#allocation10 + $0x500] sm:$0xff]
          %v2156 = vld [vmem:[#allocation10 + $0x508] sm:$0xff]
          %v2157 = vld [vmem:[#allocation10 + $0x510] sm:$0xff]
          %v2158 = vld [vmem:[#allocation10 + $0x518] sm:$0xff]
          %v2159 = vld [vmem:[#allocation10 + $0x520] sm:$0xff]
          %v2160 = vld [vmem:[#allocation10 + $0x528] sm:$0xff]
          %v2161 = vld [vmem:[#allocation10 + $0x530] sm:$0xff]
          %v2162 = vld [vmem:[#allocation10 + $0x538] sm:$0xff]
          %v2163 = vld [vmem:[#allocation10 + $0x540] sm:$0xff]
          %v2164 = vld [vmem:[#allocation10 + $0x548] sm:$0xff]
          %v2165 = vld [vmem:[#allocation10 + $0x550] sm:$0xff]
          %v2166 = vld [vmem:[#allocation10 + $0x558] sm:$0xff]
          %v2167 = vld [vmem:[#allocation10 + $0x560] sm:$0xff]
          %v2168 = vld [vmem:[#allocation10 + $0x568] sm:$0xff]
          %v2169 = vld [vmem:[#allocation10 + $0x570] sm:$0xff]
          %v2170 = vld [vmem:[#allocation10 + $0x578] sm:$0xff]
          %v2171 = vld [vmem:[#allocation10 + $0x580] sm:$0xff]
          %v2172 = vld [vmem:[#allocation10 + $0x588] sm:$0xff]
          %v2173 = vld [vmem:[#allocation10 + $0x590] sm:$0xff]
          %v2174 = vld [vmem:[#allocation10 + $0x598] sm:$0xff]
          %v2175 = vld [vmem:[#allocation10 + $0x5a0] sm:$0xff]
          %v2176 = vld [vmem:[#allocation10 + $0x5a8] sm:$0xff]
          %v2177 = vld [vmem:[#allocation10 + $0x5b0] sm:$0xff]
          %v2178 = vld [vmem:[#allocation10 + $0x5b8] sm:$0xff]
          %v2179 = vld [vmem:[#allocation10 + $0x5c0] sm:$0xff]
          %v2180 = vld [vmem:[#allocation10 + $0x5c8] sm:$0xff]
          %v2181 = vld [vmem:[#allocation10 + $0x5d0] sm:$0xff]
          %v2182 = vld [vmem:[#allocation10 + $0x5d8] sm:$0xff]
          %v2183 = vld [vmem:[#allocation10 + $0x5e0] sm:$0xff]
          %v2184 = vld [vmem:[#allocation10 + $0x5e8] sm:$0xff]
          %v2185 = vld [vmem:[#allocation10 + $0x5f0] sm:$0xff]
          %v2186 = vld [vmem:[#allocation10 + $0x5f8] sm:$0xff]
          %v2187 = vld [vmem:[#allocation12] sm:$0x3]
          %v2189 = vlaneseq
          %v2190 = vshrl.u32 %v2189, 7
          %v2191 = vsub.s32 0, %v2190
          %v2192 = vrot.slane %v2187, %v2191
          %v2193 = vlaneseq
          %v2194 = vshrl.u32 %v2193, 7
          %v2195 = vsub.s32 1, %v2194
          %v2196 = vrot.slane %v2187, %v2195
          %2199 = vmatprep.subr.mxu0 %v1996
          %2200 = vmatpush1.msra.mxu0 %v1995
          %2201 = vmatprep.subr.mxu0 %v1998
          %2202 = vmatpush1.msra.mxu0 %v1997
          %2203 = vmatprep.subr.mxu0 %v2000
          %2204 = vmatpush1.msra.mxu0 %v1999
          %2205 = vmatprep.subr.mxu0 %v2002
          %2206 = vmatpush1.msra.mxu0 %v2001
          %2207 = vmatprep.subr.mxu0 %v2004
          %2208 = vmatpush1.msra.mxu0 %v2003
          %2209 = vmatprep.subr.mxu0 %v2006
          %2210 = vmatpush1.msra.mxu0 %v2005
          %2211 = vmatprep.subr.mxu0 %v2008
          %2212 = vmatpush1.msra.mxu0 %v2007
          %2213 = vmatprep.subr.mxu0 %v2010
          %2214 = vmatpush1.msra.mxu0 %v2009
          %2215 = vmatprep.subr.mxu0 %v2012
          %2216 = vmatpush1.msra.mxu0 %v2011
          %2217 = vmatprep.subr.mxu0 %v2014
          %2218 = vmatpush1.msra.mxu0 %v2013
          %2219 = vmatprep.subr.mxu0 %v2016
          %2220 = vmatpush1.msra.mxu0 %v2015
          %2221 = vmatprep.subr.mxu0 %v2018
          %2222 = vmatpush1.msra.mxu0 %v2017
          %2223 = vmatprep.subr.mxu0 %v2020
          %2224 = vmatpush1.msra.mxu0 %v2019
          %2225 = vmatprep.subr.mxu0 %v2022
          %2226 = vmatpush1.msra.mxu0 %v2021
          %2227 = vmatprep.subr.mxu0 %v2024
          %2228 = vmatpush1.msra.mxu0 %v2023
          %2229 = vmatprep.subr.mxu0 %v2026
          %2230 = vmatpush1.msra.mxu0 %v2025
          %2231 = vmatprep.subr.mxu0 %v2028
          %2232 = vmatpush1.msra.mxu0 %v2027
          %2233 = vmatprep.subr.mxu0 %v2030
          %2234 = vmatpush1.msra.mxu0 %v2029
          %2235 = vmatprep.subr.mxu0 %v2032
          %2236 = vmatpush1.msra.mxu0 %v2031
          %2237 = vmatprep.subr.mxu0 %v2034
          %2238 = vmatpush1.msra.mxu0 %v2033
          %2239 = vmatprep.subr.mxu0 %v2036
          %2240 = vmatpush1.msra.mxu0 %v2035
          %2241 = vmatprep.subr.mxu0 %v2038
          %2242 = vmatpush1.msra.mxu0 %v2037
          %2243 = vmatprep.subr.mxu0 %v2040
          %2244 = vmatpush1.msra.mxu0 %v2039
          %2245 = vmatprep.subr.mxu0 %v2042
          %2246 = vmatpush1.msra.mxu0 %v2041
          %2247 = vmatprep.subr.mxu0 %v2044
          %2248 = vmatpush1.msra.mxu0 %v2043
          %2249 = vmatprep.subr.mxu0 %v2046
          %2250 = vmatpush1.msra.mxu0 %v2045
          %2251 = vmatprep.subr.mxu0 %v2048
          %2252 = vmatpush1.msra.mxu0 %v2047
          %2253 = vmatprep.subr.mxu0 %v2050
          %2254 = vmatpush1.msra.mxu0 %v2049
          %2255 = vmatprep.subr.mxu0 %v2052
          %2256 = vmatpush1.msra.mxu0 %v2051
          %2257 = vmatprep.subr.mxu0 %v2054
          %2258 = vmatpush1.msra.mxu0 %v2053
          %2259 = vmatprep.subr.mxu0 %v2056
          %2260 = vmatpush1.msra.mxu0 %v2055
          %2261 = vmatprep.subr.mxu0 %v2058
          %2262 = vmatpush1.msra.mxu0 %v2057
          %2263 = vmatprep.mubr.f32.mxu0 %v1990
          %2264 = vmatmul.mubr.f32.gmra.mrb[0].mxu0 %v1989
          %v2265 = vpop.f32.mrb[0].mxu0
          %v2266 = vadd.f32 %v2192, %v2265
          %v2267 = vpop.f32.mrb[0].mxu0
          %v2268 = vadd.f32 %v2196, %v2267
          %2269 = vdwg.mxu0
          %2270 = vmatprep.subr.mxu0 %v2060
          %2271 = vmatpush1.msra.mxu0 %v2059
          %2272 = vmatprep.subr.mxu0 %v2062
          %2273 = vmatpush1.msra.mxu0 %v2061
          %2274 = vmatprep.subr.mxu0 %v2064
          %2275 = vmatpush1.msra.mxu0 %v2063
          %2276 = vmatprep.subr.mxu0 %v2066
          %2277 = vmatpush1.msra.mxu0 %v2065
          %2278 = vmatprep.subr.mxu0 %v2068
          %2279 = vmatpush1.msra.mxu0 %v2067
          %2280 = vmatprep.subr.mxu0 %v2070
          %2281 = vmatpush1.msra.mxu0 %v2069
          %2282 = vmatprep.subr.mxu0 %v2072
          %2283 = vmatpush1.msra.mxu0 %v2071
          %2284 = vmatprep.subr.mxu0 %v2074
          %2285 = vmatpush1.msra.mxu0 %v2073
          %2286 = vmatprep.subr.mxu0 %v2076
          %2287 = vmatpush1.msra.mxu0 %v2075
          %2288 = vmatprep.subr.mxu0 %v2078
          %2289 = vmatpush1.msra.mxu0 %v2077
          %2290 = vmatprep.subr.mxu0 %v2080
          %2291 = vmatpush1.msra.mxu0 %v2079
          %2292 = vmatprep.subr.mxu0 %v2082
          %2293 = vmatpush1.msra.mxu0 %v2081
          %2294 = vmatprep.subr.mxu0 %v2084
          %2295 = vmatpush1.msra.mxu0 %v2083
          %2296 = vmatprep.subr.mxu0 %v2086
          %2297 = vmatpush1.msra.mxu0 %v2085
          %2298 = vmatprep.subr.mxu0 %v2088
          %2299 = vmatpush1.msra.mxu0 %v2087
          %2300 = vmatprep.subr.mxu0 %v2090
          %2301 = vmatpush1.msra.mxu0 %v2089
          %2302 = vmatprep.subr.mxu0 %v2092
          %2303 = vmatpush1.msra.mxu0 %v2091
          %2304 = vmatprep.subr.mxu0 %v2094
          %2305 = vmatpush1.msra.mxu0 %v2093
          %2306 = vmatprep.subr.mxu0 %v2096
          %2307 = vmatpush1.msra.mxu0 %v2095
          %2308 = vmatprep.subr.mxu0 %v2098
          %2309 = vmatpush1.msra.mxu0 %v2097
          %2310 = vmatprep.subr.mxu0 %v2100
          %2311 = vmatpush1.msra.mxu0 %v2099
          %2312 = vmatprep.subr.mxu0 %v2102
          %2313 = vmatpush1.msra.mxu0 %v2101
          %2314 = vmatprep.subr.mxu0 %v2104
          %2315 = vmatpush1.msra.mxu0 %v2103
          %2316 = vmatprep.subr.mxu0 %v2106
          %2317 = vmatpush1.msra.mxu0 %v2105
          %2318 = vmatprep.subr.mxu0 %v2108
          %2319 = vmatpush1.msra.mxu0 %v2107
          %2320 = vmatprep.subr.mxu0 %v2110
          %2321 = vmatpush1.msra.mxu0 %v2109
          %2322 = vmatprep.subr.mxu0 %v2112
          %2323 = vmatpush1.msra.mxu0 %v2111
          %2324 = vmatprep.subr.mxu0 %v2114
          %2325 = vmatpush1.msra.mxu0 %v2113
          %2326 = vmatprep.subr.mxu0 %v2116
          %2327 = vmatpush1.msra.mxu0 %v2115
          %2328 = vmatprep.subr.mxu0 %v2118
          %2329 = vmatpush1.msra.mxu0 %v2117
          %2330 = vmatprep.subr.mxu0 %v2120
          %2331 = vmatpush1.msra.mxu0 %v2119
          %2332 = vmatprep.subr.mxu0 %v2122
          %2333 = vmatpush1.msra.mxu0 %v2121
          %2334 = vmatprep.mubr.f32.mxu0 %v1992
          %2335 = vmatmul.mubr.f32.gmra.mrb[0].mxu0 %v1991
          %v2336 = vpop.f32.mrb[0].mxu0
          %v2337 = vadd.f32 %v2266, %v2336
          %v2338 = vpop.f32.mrb[0].mxu0
          %v2339 = vadd.f32 %v2268, %v2338
          %2340 = vdwg.mxu0
          %2341 = vmatprep.subr.mxu0 %v2124
          %2342 = vmatpush1.msra.mxu0 %v2123
          %2343 = vmatprep.subr.mxu0 %v2126
          %2344 = vmatpush1.msra.mxu0 %v2125
          %2345 = vmatprep.subr.mxu0 %v2128
          %2346 = vmatpush1.msra.mxu0 %v2127
          %2347 = vmatprep.subr.mxu0 %v2130
          %2348 = vmatpush1.msra.mxu0 %v2129
          %2349 = vmatprep.subr.mxu0 %v2132
          %2350 = vmatpush1.msra.mxu0 %v2131
          %2351 = vmatprep.subr.mxu0 %v2134
          %2352 = vmatpush1.msra.mxu0 %v2133
          %2353 = vmatprep.subr.mxu0 %v2136
          %2354 = vmatpush1.msra.mxu0 %v2135
          %2355 = vmatprep.subr.mxu0 %v2138
          %2356 = vmatpush1.msra.mxu0 %v2137
          %2357 = vmatprep.subr.mxu0 %v2140
          %2358 = vmatpush1.msra.mxu0 %v2139
          %2359 = vmatprep.subr.mxu0 %v2142
          %2360 = vmatpush1.msra.mxu0 %v2141
          %2361 = vmatprep.subr.mxu0 %v2144
          %2362 = vmatpush1.msra.mxu0 %v2143
          %2363 = vmatprep.subr.mxu0 %v2146
          %2364 = vmatpush1.msra.mxu0 %v2145
          %2365 = vmatprep.subr.mxu0 %v2148
          %2366 = vmatpush1.msra.mxu0 %v2147
          %2367 = vmatprep.subr.mxu0 %v2150
          %2368 = vmatpush1.msra.mxu0 %v2149
          %2369 = vmatprep.subr.mxu0 %v2152
          %2370 = vmatpush1.msra.mxu0 %v2151
          %2371 = vmatprep.subr.mxu0 %v2154
          %2372 = vmatpush1.msra.mxu0 %v2153
          %2373 = vmatprep.subr.mxu0 %v2156
          %2374 = vmatpush1.msra.mxu0 %v2155
          %2375 = vmatprep.subr.mxu0 %v2158
          %2376 = vmatpush1.msra.mxu0 %v2157
          %2377 = vmatprep.subr.mxu0 %v2160
          %2378 = vmatpush1.msra.mxu0 %v2159
          %2379 = vmatprep.subr.mxu0 %v2162
          %2380 = vmatpush1.msra.mxu0 %v2161
          %2381 = vmatprep.subr.mxu0 %v2164
          %2382 = vmatpush1.msra.mxu0 %v2163
          %2383 = vmatprep.subr.mxu0 %v2166
          %2384 = vmatpush1.msra.mxu0 %v2165
          %2385 = vmatprep.subr.mxu0 %v2168
          %2386 = vmatpush1.msra.mxu0 %v2167
          %2387 = vmatprep.subr.mxu0 %v2170
          %2388 = vmatpush1.msra.mxu0 %v2169
          %2389 = vmatprep.subr.mxu0 %v2172
          %2390 = vmatpush1.msra.mxu0 %v2171
          %2391 = vmatprep.subr.mxu0 %v2174
          %2392 = vmatpush1.msra.mxu0 %v2173
          %2393 = vmatprep.subr.mxu0 %v2176
          %2394 = vmatpush1.msra.mxu0 %v2175
          %2395 = vmatprep.subr.mxu0 %v2178
          %2396 = vmatpush1.msra.mxu0 %v2177
          %2397 = vmatprep.subr.mxu0 %v2180
          %2398 = vmatpush1.msra.mxu0 %v2179
          %2399 = vmatprep.subr.mxu0 %v2182
          %2400 = vmatpush1.msra.mxu0 %v2181
          %2401 = vmatprep.subr.mxu0 %v2184
          %2402 = vmatpush1.msra.mxu0 %v2183
          %2403 = vmatprep.subr.mxu0 %v2186
          %2404 = vmatpush1.msra.mxu0 %v2185
          %2405 = vmatprep.mubr.f32.mxu0 %v1994
          %2406 = vmatmul.mubr.f32.gmra.mrb[0].mxu0 %v1993
          %v2407 = vpop.f32.mrb[0].mxu0
          %v2408 = vadd.f32 %v2337, %v2407
          %v2409 = vpop.f32.mrb[0].mxu0
          %v2410 = vadd.f32 %v2339, %v2409
          %2411 = vdwg.mxu0
          %v2412 = vadd.f32 %v2408, %v2410
          %2413 = vadd.xlane.f32.xlu0 %v2412
          %v2414 = vpop.xlane.xlu0 %2413
          %v2415 = vrcp.pop 256.0
          %v2416 = vmul.f32 %v2414, %v2415
          %v2417 = vsub.f32 %v2408, %v2416
          %v2418 = vsub.f32 %v2410, %v2416
          %v2419 = vmul.f32 %v2417, %v2417
          %v2420 = vmul.f32 %v2418, %v2418
          %v2421 = vadd.f32 %v2419, %v2420
          %2422 = vadd.xlane.f32.xlu0 %v2421
          %v2423 = vpop.xlane.xlu0 %2422
          %v2424 = vmul.f32 %v2423, %v2415
          %v2425 = vadd.f32 %v2424, 1e-05
          %v2426 = vrsqrt.pop %v2425
          %v2427 = vmul.f32 %v2417, %v2426
          %v2428 = vmul.f32 %v2418, %v2426
          %v2429 = vld [vmem:[#allocation13] sm:$0x3]
          %v2431 = vlaneseq
          %v2432 = vshrl.u32 %v2431, 7
          %v2433 = vsub.s32 0, %v2432
          %v2434 = vrot.slane %v2429, %v2433
          %v2435 = vlaneseq
          %v2436 = vshrl.u32 %v2435, 7
          %v2437 = vsub.s32 1, %v2436
          %v2438 = vrot.slane %v2429, %v2437
          %v2441 = vmul.f32 %v2427, %v2434
          %v2442 = vmul.f32 %v2428, %v2438
          %v2443 = vld [vmem:[#allocation15] sm:$0x3]
          %v2445 = vlaneseq
          %v2446 = vshrl.u32 %v2445, 7
          %v2447 = vsub.s32 0, %v2446
          %v2448 = vrot.slane %v2443, %v2447
          %v2449 = vlaneseq
          %v2450 = vshrl.u32 %v2449, 7
          %v2451 = vsub.s32 1, %v2450
          %v2452 = vrot.slane %v2443, %v2451
          %v2455 = vadd.f32 %v2441, %v2448
          %v2456 = vadd.f32 %v2442, %v2452
          %v2457 = vmax.f32 %v2455, 0.0
          %v2458 = vmax.f32 %v2456, 0.0
          %v2459 = vld [vmem:[#allocation16] sm:$0xff]
          %v2460 = vld [vmem:[#allocation16 + $0x8] sm:$0xff]
          %v2461 = vld [vmem:[#allocation16 + $0x10] sm:$0xff]
          %v2462 = vld [vmem:[#allocation16 + $0x18] sm:$0xff]
          %v2463 = vld [vmem:[#allocation16 + $0x20] sm:$0xff]
          %v2464 = vld [vmem:[#allocation16 + $0x28] sm:$0xff]
          %v2465 = vld [vmem:[#allocation16 + $0x30] sm:$0xff]
          %v2466 = vld [vmem:[#allocation16 + $0x38] sm:$0xff]
          %v2467 = vld [vmem:[#allocation16 + $0x40] sm:$0xff]
          %v2468 = vld [vmem:[#allocation16 + $0x48] sm:$0xff]
          %v2469 = vld [vmem:[#allocation16 + $0x50] sm:$0xff]
          %v2470 = vld [vmem:[#allocation16 + $0x58] sm:$0xff]
          %v2471 = vld [vmem:[#allocation16 + $0x60] sm:$0xff]
          %v2472 = vld [vmem:[#allocation16 + $0x68] sm:$0xff]
          %v2473 = vld [vmem:[#allocation16 + $0x70] sm:$0xff]
          %v2474 = vld [vmem:[#allocation16 + $0x78] sm:$0xff]
          %v2475 = vld [vmem:[#allocation16 + $0x80] sm:$0xff]
          %v2476 = vld [vmem:[#allocation16 + $0x88] sm:$0xff]
          %v2477 = vld [vmem:[#allocation16 + $0x90] sm:$0xff]
          %v2478 = vld [vmem:[#allocation16 + $0x98] sm:$0xff]
          %v2479 = vld [vmem:[#allocation16 + $0xa0] sm:$0xff]
          %v2480 = vld [vmem:[#allocation16 + $0xa8] sm:$0xff]
          %v2481 = vld [vmem:[#allocation16 + $0xb0] sm:$0xff]
          %v2482 = vld [vmem:[#allocation16 + $0xb8] sm:$0xff]
          %v2483 = vld [vmem:[#allocation16 + $0xc0] sm:$0xff]
          %v2484 = vld [vmem:[#allocation16 + $0xc8] sm:$0xff]
          %v2485 = vld [vmem:[#allocation16 + $0xd0] sm:$0xff]
          %v2486 = vld [vmem:[#allocation16 + $0xd8] sm:$0xff]
          %v2487 = vld [vmem:[#allocation16 + $0xe0] sm:$0xff]
          %v2488 = vld [vmem:[#allocation16 + $0xe8] sm:$0xff]
          %v2489 = vld [vmem:[#allocation16 + $0xf0] sm:$0xff]
          %v2490 = vld [vmem:[#allocation16 + $0xf8] sm:$0xff]
          %v2491 = vld [vmem:[#allocation18] sm:$0x1]
          %v2493 = vlaneseq
          %v2494 = vshrl.u32 %v2493, 7
          %v2495 = vsub.s32 0, %v2494
          %v2496 = vrot.slane %v2491, %v2495
          %2498 = vmatprep.subr.mxu0 0.0
          %2499 = vmatpush1.msra.mxu0 %v2459
          %2500 = vmatprep.subr.mxu0 0.0
          %2501 = vmatpush1.msra.mxu0 %v2460
          %2502 = vmatprep.subr.mxu0 0.0
          %2503 = vmatpush1.msra.mxu0 %v2461
          %2504 = vmatprep.subr.mxu0 0.0
          %2505 = vmatpush1.msra.mxu0 %v2462
          %2506 = vmatprep.subr.mxu0 0.0
          %2507 = vmatpush1.msra.mxu0 %v2463
          %2508 = vmatprep.subr.mxu0 0.0
          %2509 = vmatpush1.msra.mxu0 %v2464
          %2510 = vmatprep.subr.mxu0 0.0
          %2511 = vmatpush1.msra.mxu0 %v2465
          %2512 = vmatprep.subr.mxu0 0.0
          %2513 = vmatpush1.msra.mxu0 %v2466
          %2514 = vmatprep.subr.mxu0 0.0
          %2515 = vmatpush1.msra.mxu0 %v2467
          %2516 = vmatprep.subr.mxu0 0.0
          %2517 = vmatpush1.msra.mxu0 %v2468
          %2518 = vmatprep.subr.mxu0 0.0
          %2519 = vmatpush1.msra.mxu0 %v2469
          %2520 = vmatprep.subr.mxu0 0.0
          %2521 = vmatpush1.msra.mxu0 %v2470
          %2522 = vmatprep.subr.mxu0 0.0
          %2523 = vmatpush1.msra.mxu0 %v2471
          %2524 = vmatprep.subr.mxu0 0.0
          %2525 = vmatpush1.msra.mxu0 %v2472
          %2526 = vmatprep.subr.mxu0 0.0
          %2527 = vmatpush1.msra.mxu0 %v2473
          %2528 = vmatprep.subr.mxu0 0.0
          %2529 = vmatpush1.msra.mxu0 %v2474
          %2530 = vmatprep.subr.mxu0 0.0
          %2531 = vmatpush1.msra.mxu0 %v2475
          %2532 = vmatprep.subr.mxu0 0.0
          %2533 = vmatpush1.msra.mxu0 %v2476
          %2534 = vmatprep.subr.mxu0 0.0
          %2535 = vmatpush1.msra.mxu0 %v2477
          %2536 = vmatprep.subr.mxu0 0.0
          %2537 = vmatpush1.msra.mxu0 %v2478
          %2538 = vmatprep.subr.mxu0 0.0
          %2539 = vmatpush1.msra.mxu0 %v2479
          %2540 = vmatprep.subr.mxu0 0.0
          %2541 = vmatpush1.msra.mxu0 %v2480
          %2542 = vmatprep.subr.mxu0 0.0
          %2543 = vmatpush1.msra.mxu0 %v2481
          %2544 = vmatprep.subr.mxu0 0.0
          %2545 = vmatpush1.msra.mxu0 %v2482
          %2546 = vmatprep.subr.mxu0 0.0
          %2547 = vmatpush1.msra.mxu0 %v2483
          %2548 = vmatprep.subr.mxu0 0.0
          %2549 = vmatpush1.msra.mxu0 %v2484
          %2550 = vmatprep.subr.mxu0 0.0
          %2551 = vmatpush1.msra.mxu0 %v2485
          %2552 = vmatprep.subr.mxu0 0.0
          %2553 = vmatpush1.msra.mxu0 %v2486
          %2554 = vmatprep.subr.mxu0 0.0
          %2555 = vmatpush1.msra.mxu0 %v2487
          %2556 = vmatprep.subr.mxu0 0.0
          %2557 = vmatpush1.msra.mxu0 %v2488
          %2558 = vmatprep.subr.mxu0 0.0
          %2559 = vmatpush1.msra.mxu0 %v2489
          %2560 = vmatprep.subr.mxu0 0.0
          %2561 = vmatpush1.msra.mxu0 %v2490
          %2562 = vmatprep.mubr.f32.mxu0 %v2458
          %2563 = vmatmul.mubr.f32.gmra.mrb[0].mxu0 %v2457
          %v2564 = vpop.f32.mrb[0].mxu0
          %v2565 = vadd.f32 %v2496, %v2564
          %v2566 = vpop.f32.mrb[0].mxu0
          %2567 = vdwg.mxu0
          %2568 = vst [vmem:[%s528] sm:$0xff] %v2565
        $region107: #{tpu_custom_call.1} parent=55 // pred_fallthru
          _
        %s2569 = sand.u32 %s260, 1
        %s2570 = scalar_lea.sflag [#allocation6], %s2569
        %s2571 = sand.u32 %s260, 1
        %s2572 = smul.addr %s2571, 8
        %s2573 = scalar_lea.vmem [#allocation19], %s2572
        // Predicated region
        $region108: #{tpu_custom_call.1} parent=55 // pred_check
          %p2574 = pneg %p270
        $region109: #{tpu_custom_call.1} parent=55 // pred_check_branch
          %2576 = sbr.rel (%p2574) target = $region111
        $region110: #{tpu_custom_call.1} parent=55 // pred_region
          %s2578 = ssub.s32 128, 128
          %2579 = vsyncadd %s2570, %s2578
          %s2580 = smul.addr %s36, 128
          %s2581 = scalar_lea.hbm %s9, %s2580
          %s2583 = sshll.u32 %s2573, 4
          %s2584 = int_to_ptr.vmem [resolvable:$true] %s2583
          %2586 = dma.vmem_to_hbm [thread:$0]  %s2584, 128, %s2581, %s2570
        $region111: #{tpu_custom_call.1} parent=55 // pred_fallthru
          _
      $region56: #{tpu_custom_call.1} parent=5 // pred_fallthru
        _
      %p2587 = scmp.le.s32.totalorder 2, %s27
      // Predicated region
      $region112: #{tpu_custom_call.1} parent=5 // pred_check
        %p2588 = pneg %p2587
      $region113: #{tpu_custom_call.1} parent=5 // pred_check_branch
        %2590 = sbr.rel (%p2588) target = $region115
      $region114: #{tpu_custom_call.1} parent=5 // pred_region
        %s2591 = ssub.s32 %s27, 2
        // Predicated region
        $region116: #{tpu_custom_call.1} parent=114 // pred_check
          %p2592 = pneg %p276
        $region117: #{tpu_custom_call.1} parent=114 // pred_check_branch
          %2594 = sbr.rel (%p2592) target = $region119
        $region118: #{tpu_custom_call.1} parent=114 // pred_region
          %s2595 = sand.u32 %s261, 1
          %s2596 = scalar_lea.sflag [#allocation6], %s2595
          %s2597 = sand.u32 %s261, 1
          %s2598 = smul.addr %s2597, 8
          %s2599 = scalar_lea.vmem [#allocation19], %s2598
          %2600 = dma.done %s2596, 128
        $region119: #{tpu_custom_call.1} parent=114 // pred_fallthru
          _
      $region115: #{tpu_custom_call.1} parent=5 // pred_fallthru
        _
    $region6: #{tpu_custom_call.1} parent=1 // loop_footer
      %s31 = sadd.s32 1, %s27
    $region7: #{tpu_custom_call.1} parent=1 // loop_footer_branch
      %26 = sbr.rel target = $region3
    $region8: #{tpu_custom_call.1} parent=1 // loop_exit
      _
    %2601 = vsyncpa [#allocation5], 1
    %s2602 = scalar_lea.sflag [#allocation5], 1
    %2603 = vsyncpa %s2602, 1
    %2604 = vsyncpa [#allocation8], 1
    %s2605 = scalar_lea.sflag [#allocation8], 1
    %2606 = vsyncpa %s2605, 1
    %2607 = vsyncpa [#allocation11], 1
    %2608 = vsyncpa [#allocation14], 1
    %2609 = vsyncpa [#allocation17], 1
    %2610 = vsyncpa [#allocation6], 1
    %s2611 = scalar_lea.sflag [#allocation6], 1
    %2612 = vsyncpa %s2611, 1

</llo_original>
